<compile_context>
chip_gen: v7x
topology: tpu7x:2x2x1
jax: 0.10.0
libtpu: 0.0.40
codegen_flags: <defaults>
</compile_context>

<pallas_src>
import jax
import jax.numpy as jnp
from jax.experimental import pallas as pl
from jax.experimental.pallas import tpu as pltpu


# ---------------------------------------------------------------------------
# Static problem configuration
# ---------------------------------------------------------------------------
CIN, C1, C2 = 3, 32, 64        # backbone channel widths
H = W = 16                     # input spatial size
KS = 3                         # conv kernel size
OH, OW = H // 2, W // 2        # stride-2 output grid (8, 8)
NPIX = OH * OW                 # 64 layer-2 output pixels per image
HALF = NPIX // 2               # 32 packed output rows per image (2 pixels/row)
NPLANE = 6                     # P00, P01, P10, P11, P01c, P11c
M1 = NPLANE * NPIX             # 384 layer-1 rows per image
K1 = KS * KS * CIN             # 27 real layer-1 reduction size
K1_P = 128                     # layer-1 reduction padded (lane-dense LHS)
C1_P = 128                     # layer-1 output channels padded
K2 = KS * KS * C1_P            # 1152 per-pixel layer-2 reduction size
_BN_EPS = 1e-5


# ---------------------------------------------------------------------------
# Fused Pallas kernel: conv3x3+BN+ReLU -> conv3x3(s=2)+BN+ReLU, b_tile images
# ---------------------------------------------------------------------------
def _make_fused_kernel(b_tile):
    f32, bf16 = jnp.float32, jnp.bfloat16

    def kernel(x_ref, w1_ref, b1_ref, w2_ref, b2_ref, o_ref, lhs2_ref):
        # x_ref   : (b_tile, M1, K1_P)   bf16  layer-1 im2col, quadrant-plane order
        # w1_ref  : (K1_P, C1_P)         bf16  layer-1 weights, BN scale folded
        # b1_ref  : (1, C1_P)            f32
        # w2_ref  : (2*K2, 2*C2)         bf16  layer-2 weights, block-diag packed
        # b2_ref  : (1, 2*C2)            f32
        # o_ref   : (b_tile, HALF, 2*C2) f32   two output pixels packed per row
        # lhs2_ref: (b_tile, HALF, 2*K2) bf16  scratch: layer-2 im2col LHS
        col0 = (jax.lax.broadcasted_iota(jnp.int32, (NPIX, C1_P), 0) % OW) == 0
        zrow = jnp.zeros((OW, C1_P), f32)

        def rowshift(t):          # value at (oi - 1, oj); zeros where oi == 0
            return jnp.concatenate([zrow, t[:NPIX - OW]], axis=0)

        w1 = w1_ref[...]
        bias1 = b1_ref[...]
        for b in range(b_tile):
            # ---- layer 1: one lane-dense K=128 MXU dot (all 9 taps folded) ----
            acc = jnp.dot(x_ref[b], w1, preferred_element_type=f32)   # (M1, 128)
            y1 = jnp.maximum(acc + bias1, 0.0)                        # f32
            p00, p01 = y1[0 * NPIX:1 * NPIX], y1[1 * NPIX:2 * NPIX]
            p10, p11 = y1[2 * NPIX:3 * NPIX], y1[3 * NPIX:4 * NPIX]
            # column-shifted odd-column planes; oj == 0 rows are layer-2 padding
            p01c = jnp.where(col0, 0.0, y1[4 * NPIX:5 * NPIX])
            p11c = jnp.where(col0, 0.0, y1[5 * NPIX:6 * NPIX])
            # 3x3 stride-2 taps in (dh, dw) order, each (NPIX, C1_P)
            taps = (rowshift(p11c), rowshift(p10), rowshift(p11),
                    p01c, p00, p01,
                    p11c, p10, p11)
            # layer-2 im2col rows: lanes = [taps of pixel q | taps of pixel q+32]
            lhs2_ref[b] = jnp.concatenate(
                [t[:HALF] for t in taps] + [t[HALF:] for t in taps],
                axis=1).astype(bf16)                                  # (32, 2304)

        # ---- layer 2: single deep dot, M = b_tile*32, K = 2304, N = 128 -------
        lhs2 = lhs2_ref[...].reshape(b_tile * HALF, 2 * K2)
        acc2 = jnp.dot(lhs2, w2_ref[...], preferred_element_type=f32)
        o_ref[...] = jnp.maximum(acc2 + b2_ref[...], 0.0).reshape(
            b_tile, HALF, 2 * C2)

    return kernel


# ---------------------------------------------------------------------------
# Parameter folding / packing (pure JAX glue on tiny tensors)
# ---------------------------------------------------------------------------
def _fold_and_pack_params(params):
    s1 = params["bn1_gamma"] / jnp.sqrt(params["bn1_var"] + _BN_EPS)
    b1 = params["bn1_beta"] - params["bn1_mean"] * s1
    s2 = params["bn2_gamma"] / jnp.sqrt(params["bn2_var"] + _BN_EPS)
    b2 = params["bn2_beta"] - params["bn2_mean"] * s2

    # layer-1: (C1, CIN, 3, 3) -> (kh, kw, cin, cout), fold BN scale,
    # flatten K = (kh*3 + kw)*CIN + cin, pad to (128, 128), bf16.
    w1 = jnp.transpose(params["w1"], (2, 3, 1, 0)) * s1
    w1 = w1.reshape(K1, C1)
    w1 = jnp.pad(w1, ((0, K1_P - K1), (0, C1_P - C1))).astype(jnp.bfloat16)

    # layer-2: (C2, C1, 3, 3) -> (kh, kw, cin, cout); pad cin to 128 so the K
    # rows line up with the 128-lane y1 taps; flatten to (1152, 64); pack as a
    # block-diagonal (2304, 128) so one matmul row emits two packed pixels.
    w2 = jnp.transpose(params["w2"], (2, 3, 1, 0)) * s2
    w2 = jnp.pad(w2, ((0, 0), (0, 0), (0, C1_P - C1), (0, 0)))
    w2a = w2.reshape(K2, C2)
    w2bd = jnp.zeros((2 * K2, 2 * C2), jnp.float32)
    w2bd = w2bd.at[:K2, :C2].set(w2a).at[K2:, C2:].set(w2a)
    w2bd = w2bd.astype(jnp.bfloat16)

    b1p = jnp.pad(b1, (0, C1_P - C1)).reshape(1, C1_P).astype(jnp.float32)
    b2p = jnp.concatenate([b2, b2]).reshape(1, 2 * C2).astype(jnp.float32)
    return w1, b1p, w2bd, b2p


def _im2col_quadrant(x_nchw):
    """Layer-1 im2col with rows grouped into the 6 stride-2 quadrant planes."""
    n = x_nchw.shape[0]
    x = jnp.transpose(x_nchw, (0, 2, 3, 1)).astype(jnp.float32)    # NHWC
    xp = jnp.pad(x, ((0, 0), (1, 1), (1, 1), (0, 0)))              # 1-px halo
    pat = jnp.concatenate(
        [xp[:, dh:dh + H, dw:dw + W, :] for dh in range(KS) for dw in range(KS)],
        axis=-1)                                                   # (n,16,16,27)
    # pixel (i, j) = (2a + rp, 2b + cp)  ->  planes (rp, cp) over the half grid
    q = pat.reshape(n, OH, 2, OW, 2, K1)
    q = jnp.transpose(q, (0, 2, 4, 1, 3, 5))                       # (n,rp,cp,a,b,K1)
    base = q.reshape(n, 4 * NPIX, K1)                              # P00,P01,P10,P11
    # column-shifted odd-column planes: pixel (2a+rp, 2b-1); b == 0 -> zeros
    zcol = jnp.zeros((n, OH, 1, K1), jnp.float32)
    p01c = jnp.concatenate([zcol, q[:, 0, 1, :, :-1, :]], axis=2).reshape(n, NPIX, K1)
    p11c = jnp.concatenate([zcol, q[:, 1, 1, :, :-1, :]], axis=2).reshape(n, NPIX, K1)
    allp = jnp.concatenate([base, p01c, p11c], axis=1)             # (n, 384, 27)
    allp = jnp.pad(allp, ((0, 0), (0, 0), (0, K1_P - K1)))
    return allp.astype(jnp.bfloat16)


# ---------------------------------------------------------------------------
# Forward (matches ImageFeatureExtractor.forward semantics, NCHW in/out)
# ---------------------------------------------------------------------------
@jax.jit
def image_feature_extractor_forward(x_nchw, params):
    """x_nchw: (N, 3, 16, 16) f32 -> (N, 64, 8, 8) f32."""
    n = x_nchw.shape[0]
    w1, b1, w2, b2 = _fold_and_pack_params(params)
    pat = _im2col_quadrant(x_nchw)                                 # (n, 384, 128) bf16

    # Batch several images per grid step (amortize ~0.35us step overhead) while
    # keeping >= 2 grid steps when possible (v7x has two TensorCores).
    b_tile = max(1, min(8, n // 2))
    n_pad = -(-n // b_tile) * b_tile
    if n_pad != n:
        pat = jnp.pad(pat, ((0, n_pad - n), (0, 0), (0, 0)))

    out = pl.pallas_call(
        _make_fused_kernel(b_tile),
        out_shape=jax.ShapeDtypeStruct((n_pad, HALF, 2 * C2), jnp.float32),
        grid_spec=pltpu.PrefetchScalarGridSpec(
            num_scalar_prefetch=0,
            grid=(n_pad // b_tile,),
            in_specs=[
                pl.BlockSpec((b_tile, M1, K1_P), lambda i: (i, 0, 0)),
                pl.BlockSpec((K1_P, C1_P), lambda i: (0, 0)),
                pl.BlockSpec((1, C1_P), lambda i: (0, 0)),
                pl.BlockSpec((2 * K2, 2 * C2), lambda i: (0, 0)),
                pl.BlockSpec((1, 2 * C2), lambda i: (0, 0)),
            ],
            out_specs=pl.BlockSpec((b_tile, HALF, 2 * C2), lambda i: (i, 0, 0)),
            scratch_shapes=[pltpu.VMEM((b_tile, HALF, 2 * K2), jnp.bfloat16)],
        ),
        compiler_params=pltpu.CompilerParams(
            dimension_semantics=("parallel",)),
    )(pat, w1, b1, w2, b2)

    # Unpack: lanes [0:64] = pixels with oi in 0..3, lanes [64:128] = oi in 4..7.
    out = out[:n]
    top = out[:, :, :C2].reshape(n, OH // 2, OW, C2)
    bot = out[:, :, C2:].reshape(n, OH // 2, OW, C2)
    y = jnp.concatenate([top, bot], axis=1)                        # (n, 8, 8, 64)
    return jnp.transpose(y, (0, 3, 1, 2))                          # NHWC -> NCHW


# ---------------------------------------------------------------------------
# Deterministic parameters for the representative frozen backbone
# ---------------------------------------------------------------------------
def init_params(key, cin=CIN, c1=C1, c2=C2):
    ks = jax.random.split(key, 10)
    return {
        "w1": jax.random.normal(ks[0], (c1, cin, 3, 3), jnp.float32) * 0.1,
        "bn1_gamma": 1.0 + 0.1 * jax.random.normal(ks[1], (c1,), jnp.float32),
        "bn1_beta": 0.1 * jax.random.normal(ks[2], (c1,), jnp.float32),
        "bn1_mean": 0.05 * jax.random.normal(ks[3], (c1,), jnp.float32),
        "bn1_var": 0.5 + jnp.abs(jax.random.normal(ks[4], (c1,), jnp.float32)),
        "w2": jax.random.normal(ks[5], (c2, c1, 3, 3), jnp.float32) * 0.1,
        "bn2_gamma": 1.0 + 0.1 * jax.random.normal(ks[6], (c2,), jnp.float32),
        "bn2_beta": 0.1 * jax.random.normal(ks[7], (c2,), jnp.float32),
        "bn2_mean": 0.05 * jax.random.normal(ks[8], (c2,), jnp.float32),
        "bn2_var": 0.5 + jnp.abs(jax.random.normal(ks[9], (c2,), jnp.float32)),
    }


# ---------------------------------------------------------------------------
# Pure-JAX reference (same bf16 operand quantization as the kernel)
# ---------------------------------------------------------------------------
def _ref_forward(x_nchw, params):
    q = lambda t: t.astype(jnp.bfloat16).astype(jnp.float32)

    def conv_bn_relu(x, w, g, beta, m, v, stride):
        s = g / jnp.sqrt(v + _BN_EPS)
        wf = q(w * s[:, None, None, None])     # BN scale folded, bf16-rounded
        bias = (beta - m * s).reshape(1, -1, 1, 1)
        y = jax.lax.conv_general_dilated(
            q(x), wf, (stride, stride), ((1, 1), (1, 1)),
            dimension_numbers=("NCHW", "OIHW", "NCHW"),
            precision=jax.lax.Precision.HIGHEST)
        return jnp.maximum(y + bias, 0.0)

    y = conv_bn_relu(x_nchw, params["w1"], params["bn1_gamma"],
                     params["bn1_beta"], params["bn1_mean"],
                     params["bn1_var"], 1)
    y = conv_bn_relu(y, params["w2"], params["bn2_gamma"],
                     params["bn2_beta"], params["bn2_mean"],
                     params["bn2_var"], 2)
    return y


if __name__ == "__main__":
    key = jax.random.PRNGKey(0)
    k_x, k_p = jax.random.split(key)

    x = jax.random.normal(k_x, (2, CIN, H, W), jnp.float32)   # NCHW input
    params = init_params(k_p)

    out = jax.block_until_ready(image_feature_extractor_forward(x, params))
    ref = jax.block_until_ready(_ref_forward(x, params))

    assert out.shape == (2, C2, H // 2, W // 2), out.shape
    max_err = float(jnp.max(jnp.abs(out - ref)))
    assert jnp.allclose(out, ref, atol=1e-2, rtol=1e-2), max_err

    print("KERNEL_OK")
</pallas_src>

<mosaic_0001>
module attributes {stable_mosaic.version = 11 : i64} {
  func.func @kernel(%arg0: i32, %arg1: memref<1x384x128xbf16, #tpu.memory_space<vmem>>, %arg2: memref<128x128xbf16, #tpu.memory_space<vmem>>, %arg3: memref<1x128xf32, #tpu.memory_space<vmem>>, %arg4: memref<2304x128xbf16, #tpu.memory_space<vmem>>, %arg5: memref<1x128xf32, #tpu.memory_space<vmem>>, %arg6: memref<1x32x128xf32, #tpu.memory_space<vmem>>, %arg7: memref<1x32x2304xbf16, #tpu.memory_space<vmem>>) attributes {dimension_semantics = [#tpu.dimension_semantics<parallel>], iteration_bounds = array<i64: 2>, scalar_prefetch = 0 : i64, scratch_operands = 1 : i64, tpu.core_type = #tpu.core_type<tc>, window_params = [{transform_indices = @transform_0, window_bounds = array<i64: 1, 384, 128>}, {pipeline_mode = #tpu.pipeline_mode<synchronous>, transform_indices = @transform_1, window_bounds = array<i64: 128, 128>}, {pipeline_mode = #tpu.pipeline_mode<synchronous>, transform_indices = @transform_2, window_bounds = array<i64: 1, 128>}, {pipeline_mode = #tpu.pipeline_mode<synchronous>, transform_indices = @transform_3, window_bounds = array<i64: 2304, 128>}, {pipeline_mode = #tpu.pipeline_mode<synchronous>, transform_indices = @transform_4, window_bounds = array<i64: 1, 128>}, {transform_indices = @transform_5, window_bounds = array<i64: 1, 32, 128>}]} {
    %0 = tpu.iota {dimensions = array<i32: 0>} : vector<64x128xi32>
    %c8_i32 = arith.constant 8 : i32
    %c0_i32 = arith.constant 0 : i32
    %1 = arith.cmpi eq, %c8_i32, %c0_i32 : i32
    %c1_i32 = arith.constant 1 : i32
    %2 = arith.select %1, %c1_i32, %c8_i32 : i32
    %3 = vector.broadcast %2 : i32 to vector<64x128xi32>
    %4 = arith.remsi %0, %3 : vector<64x128xi32>
    %c0_i32_0 = arith.constant 0 : i32
    %5 = vector.broadcast %c0_i32_0 : i32 to vector<64x128xi32>
    %6 = arith.cmpi ne, %4, %5 : vector<64x128xi32>
    %c0_i32_1 = arith.constant 0 : i32
    %7 = vector.broadcast %c0_i32_1 : i32 to vector<64x128xi32>
    %8 = arith.cmpi slt, %4, %7 : vector<64x128xi32>
    %c0_i32_2 = arith.constant 0 : i32
    %9 = arith.cmpi slt, %2, %c0_i32_2 : i32
    %10 = vector.broadcast %9 : i1 to vector<64x128xi1>
    %11 = vector.broadcast %10 : vector<64x128xi1> to vector<64x128xi1>
    %12 = arith.xori %8, %11 : vector<64x128xi1>
    %13 = arith.andi %12, %6 : vector<64x128xi1>
    %14 = vector.broadcast %2 : i32 to vector<64x128xi32>
    %15 = arith.addi %4, %14 : vector<64x128xi32>
    %16 = arith.select %13, %15, %4 : vector<64x128xi1>, vector<64x128xi32>
    %c0_i32_3 = arith.constant 0 : i32
    %17 = vector.broadcast %c0_i32_3 : i32 to vector<64x128xi32>
    %18 = arith.cmpi eq, %16, %17 : vector<64x128xi32>
    %cst = arith.constant 0.000000e+00 : f32
    %19 = vector.broadcast %cst : f32 to vector<8x128xf32>
    %c0 = arith.constant 0 : index
    %c0_4 = arith.constant 0 : index
    %20 = vector.load %arg2[%c0, %c0_4] : memref<128x128xbf16, #tpu.memory_space<vmem>>, vector<128x128xbf16>
    %c0_5 = arith.constant 0 : index
    %c0_6 = arith.constant 0 : index
    %21 = vector.load %arg3[%c0_5, %c0_6] : memref<1x128xf32, #tpu.memory_space<vmem>>, vector<1x128xf32>
    %c0_7 = arith.constant 0 : index
    %c0_8 = arith.constant 0 : index
    %c0_9 = arith.constant 0 : index
    %22 = vector.load %arg1[%c0_7, %c0_8, %c0_9] : memref<1x384x128xbf16, #tpu.memory_space<vmem>>, vector<1x384x128xbf16>
    %23 = vector.shape_cast %22 : vector<1x384x128xbf16> to vector<384x128xbf16>
    %cst_10 = arith.constant dense<0.000000e+00> : vector<384x128xf32>
    %24 = tpu.matmul %23, %20, %cst_10 {dimension_numbers = #tpu.dot_dimension_numbers<[1], [0], [0], [1], [0, 0, 1, 1], [], []>} : vector<384x128xbf16>, vector<128x128xbf16>, vector<384x128xf32> -> vector<384x128xf32>
    %25 = vector.broadcast %21 : vector<1x128xf32> to vector<384x128xf32>
    %26 = arith.addf %24, %25 : vector<384x128xf32>
    %cst_11 = arith.constant 0.000000e+00 : f32
    %27 = vector.broadcast %cst_11 : f32 to vector<384x128xf32>
    %28 = arith.maximumf %26, %27 : vector<384x128xf32>
    %29 = vector.extract_strided_slice %28 {offsets = [0, 0], sizes = [64, 128], strides = [1, 1]} : vector<384x128xf32> to vector<64x128xf32>
    %30 = vector.extract_strided_slice %28 {offsets = [64, 0], sizes = [64, 128], strides = [1, 1]} : vector<384x128xf32> to vector<64x128xf32>
    %31 = vector.extract_strided_slice %28 {offsets = [128, 0], sizes = [64, 128], strides = [1, 1]} : vector<384x128xf32> to vector<64x128xf32>
    %32 = vector.extract_strided_slice %28 {offsets = [192, 0], sizes = [64, 128], strides = [1, 1]} : vector<384x128xf32> to vector<64x128xf32>
    %33 = vector.extract_strided_slice %28 {offsets = [256, 0], sizes = [64, 128], strides = [1, 1]} : vector<384x128xf32> to vector<64x128xf32>
    %cst_12 = arith.constant 0.000000e+00 : f32
    %34 = vector.broadcast %cst_12 : f32 to vector<64x128xf32>
    %35 = arith.select %18, %34, %33 : vector<64x128xi1>, vector<64x128xf32>
    %36 = vector.extract_strided_slice %28 {offsets = [320, 0], sizes = [64, 128], strides = [1, 1]} : vector<384x128xf32> to vector<64x128xf32>
    %cst_13 = arith.constant 0.000000e+00 : f32
    %37 = vector.broadcast %cst_13 : f32 to vector<64x128xf32>
    %38 = arith.select %18, %37, %36 : vector<64x128xi1>, vector<64x128xf32>
    %39 = vector.extract_strided_slice %38 {offsets = [0, 0], sizes = [56, 128], strides = [1, 1]} : vector<64x128xf32> to vector<56x128xf32>
    %40 = tpu.concatenate %19, %39 in 0 : vector<8x128xf32>, vector<56x128xf32> -> vector<64x128xf32>
    %41 = vector.extract_strided_slice %31 {offsets = [0, 0], sizes = [56, 128], strides = [1, 1]} : vector<64x128xf32> to vector<56x128xf32>
    %42 = tpu.concatenate %19, %41 in 0 : vector<8x128xf32>, vector<56x128xf32> -> vector<64x128xf32>
    %43 = vector.extract_strided_slice %32 {offsets = [0, 0], sizes = [56, 128], strides = [1, 1]} : vector<64x128xf32> to vector<56x128xf32>
    %44 = tpu.concatenate %19, %43 in 0 : vector<8x128xf32>, vector<56x128xf32> -> vector<64x128xf32>
    %45 = vector.extract_strided_slice %40 {offsets = [0, 0], sizes = [32, 128], strides = [1, 1]} : vector<64x128xf32> to vector<32x128xf32>
    %46 = vector.extract_strided_slice %42 {offsets = [0, 0], sizes = [32, 128], strides = [1, 1]} : vector<64x128xf32> to vector<32x128xf32>
    %47 = vector.extract_strided_slice %44 {offsets = [0, 0], sizes = [32, 128], strides = [1, 1]} : vector<64x128xf32> to vector<32x128xf32>
    %48 = vector.extract_strided_slice %35 {offsets = [0, 0], sizes = [32, 128], strides = [1, 1]} : vector<64x128xf32> to vector<32x128xf32>
    %49 = vector.extract_strided_slice %29 {offsets = [0, 0], sizes = [32, 128], strides = [1, 1]} : vector<64x128xf32> to vector<32x128xf32>
    %50 = vector.extract_strided_slice %30 {offsets = [0, 0], sizes = [32, 128], strides = [1, 1]} : vector<64x128xf32> to vector<32x128xf32>
    %51 = vector.extract_strided_slice %38 {offsets = [0, 0], sizes = [32, 128], strides = [1, 1]} : vector<64x128xf32> to vector<32x128xf32>
    %52 = vector.extract_strided_slice %31 {offsets = [0, 0], sizes = [32, 128], strides = [1, 1]} : vector<64x128xf32> to vector<32x128xf32>
    %53 = vector.extract_strided_slice %32 {offsets = [0, 0], sizes = [32, 128], strides = [1, 1]} : vector<64x128xf32> to vector<32x128xf32>
    %54 = vector.extract_strided_slice %40 {offsets = [32, 0], sizes = [32, 128], strides = [1, 1]} : vector<64x128xf32> to vector<32x128xf32>
    %55 = vector.extract_strided_slice %42 {offsets = [32, 0], sizes = [32, 128], strides = [1, 1]} : vector<64x128xf32> to vector<32x128xf32>
    %56 = vector.extract_strided_slice %44 {offsets = [32, 0], sizes = [32, 128], strides = [1, 1]} : vector<64x128xf32> to vector<32x128xf32>
    %57 = vector.extract_strided_slice %35 {offsets = [32, 0], sizes = [32, 128], strides = [1, 1]} : vector<64x128xf32> to vector<32x128xf32>
    %58 = vector.extract_strided_slice %29 {offsets = [32, 0], sizes = [32, 128], strides = [1, 1]} : vector<64x128xf32> to vector<32x128xf32>
    %59 = vector.extract_strided_slice %30 {offsets = [32, 0], sizes = [32, 128], strides = [1, 1]} : vector<64x128xf32> to vector<32x128xf32>
    %60 = vector.extract_strided_slice %38 {offsets = [32, 0], sizes = [32, 128], strides = [1, 1]} : vector<64x128xf32> to vector<32x128xf32>
    %61 = vector.extract_strided_slice %31 {offsets = [32, 0], sizes = [32, 128], strides = [1, 1]} : vector<64x128xf32> to vector<32x128xf32>
    %62 = vector.extract_strided_slice %32 {offsets = [32, 0], sizes = [32, 128], strides = [1, 1]} : vector<64x128xf32> to vector<32x128xf32>
    %63 = tpu.concatenate %45, %46, %47, %48, %49, %50, %51, %52, %53, %54, %55, %56, %57, %58, %59, %60 in 1 : vector<32x128xf32>, vector<32x128xf32>, vector<32x128xf32>, vector<32x128xf32>, vector<32x128xf32>, vector<32x128xf32>, vector<32x128xf32>, vector<32x128xf32>, vector<32x128xf32>, vector<32x128xf32>, vector<32x128xf32>, vector<32x128xf32>, vector<32x128xf32>, vector<32x128xf32>, vector<32x128xf32>, vector<32x128xf32> -> vector<32x2048xf32>
    %64 = tpu.concatenate %61, %62 in 1 : vector<32x128xf32>, vector<32x128xf32> -> vector<32x256xf32>
    %65 = tpu.concatenate %63, %64 in 1 : vector<32x2048xf32>, vector<32x256xf32> -> vector<32x2304xf32>
    %66 = arith.truncf %65 : vector<32x2304xf32> to vector<32x2304xbf16>
    %c0_14 = arith.constant 0 : index
    %c0_15 = arith.constant 0 : index
    %c0_16 = arith.constant 0 : index
    %67 = vector.load %arg7[%c0_14, %c0_15, %c0_16] : memref<1x32x2304xbf16, #tpu.memory_space<vmem>>, vector<1x32x2304xbf16>
    %68 = vector.shape_cast %67 : vector<1x32x2304xbf16> to vector<32x2304xbf16>
    %69 = vector.shape_cast %66 : vector<32x2304xbf16> to vector<1x32x2304xbf16>
    tpu.vector_store %arg7[%c0_14, %c0_15, %c0_16], %69 {strides = array<i32>} : memref<1x32x2304xbf16, #tpu.memory_space<vmem>>, vector<1x32x2304xbf16>,
    %c0_17 = arith.constant 0 : index
    %c0_18 = arith.constant 0 : index
    %c0_19 = arith.constant 0 : index
    %70 = vector.load %arg7[%c0_17, %c0_18, %c0_19] : memref<1x32x2304xbf16, #tpu.memory_space<vmem>>, vector<1x32x2304xbf16>
    %71 = vector.shape_cast %70 : vector<1x32x2304xbf16> to vector<32x2304xbf16>
    %c0_20 = arith.constant 0 : index
    %c0_21 = arith.constant 0 : index
    %72 = vector.load %arg4[%c0_20, %c0_21] : memref<2304x128xbf16, #tpu.memory_space<vmem>>, vector<2304x128xbf16>
    %cst_22 = arith.constant dense<0.000000e+00> : vector<32x128xf32>
    %73 = tpu.matmul %71, %72, %cst_22 {dimension_numbers = #tpu.dot_dimension_numbers<[1], [0], [0], [1], [0, 0, 1, 1], [], []>} : vector<32x2304xbf16>, vector<2304x128xbf16>, vector<32x128xf32> -> vector<32x128xf32>
    %c0_23 = arith.constant 0 : index
    %c0_24 = arith.constant 0 : index
    %74 = vector.load %arg5[%c0_23, %c0_24] : memref<1x128xf32, #tpu.memory_space<vmem>>, vector<1x128xf32>
    %75 = vector.broadcast %74 : vector<1x128xf32> to vector<32x128xf32>
    %76 = arith.addf %73, %75 : vector<32x128xf32>
    %cst_25 = arith.constant 0.000000e+00 : f32
    %77 = vector.broadcast %cst_25 : f32 to vector<32x128xf32>
    %78 = arith.maximumf %76, %77 : vector<32x128xf32>
    %79 = vector.shape_cast %78 : vector<32x128xf32> to vector<1x32x128xf32>
    %c0_26 = arith.constant 0 : index
    %c0_27 = arith.constant 0 : index
    %c0_28 = arith.constant 0 : index
    %80 = vector.load %arg6[%c0_26, %c0_27, %c0_28] : memref<1x32x128xf32, #tpu.memory_space<vmem>>, vector<1x32x128xf32>
    tpu.vector_store %arg6[%c0_26, %c0_27, %c0_28], %79 {strides = array<i32>} : memref<1x32x128xf32, #tpu.memory_space<vmem>>, vector<1x32x128xf32>,
    return
  }
  func.func @transform_0(%arg0: i32) -> (i32, i32, i32) {
    %c0_i32 = arith.constant 0 : i32
    %c0_i32_0 = arith.constant 0 : i32
    %c0_i32_1 = arith.constant 0 : i32
    return %arg0, %c0_i32, %c0_i32_0 : i32, i32, i32
  }
  func.func @transform_1(%arg0: i32) -> (i32, i32) {
    %c0_i32 = arith.constant 0 : i32
    %c0_i32_0 = arith.constant 0 : i32
    %c0_i32_1 = arith.constant 0 : i32
    return %c0_i32, %c0_i32_0 : i32, i32
  }
  func.func @transform_2(%arg0: i32) -> (i32, i32) {
    %c0_i32 = arith.constant 0 : i32
    %c0_i32_0 = arith.constant 0 : i32
    %c0_i32_1 = arith.constant 0 : i32
    return %c0_i32, %c0_i32_0 : i32, i32
  }
  func.func @transform_3(%arg0: i32) -> (i32, i32) {
    %c0_i32 = arith.constant 0 : i32
    %c0_i32_0 = arith.constant 0 : i32
    %c0_i32_1 = arith.constant 0 : i32
    return %c0_i32, %c0_i32_0 : i32, i32
  }
  func.func @transform_4(%arg0: i32) -> (i32, i32) {
    %c0_i32 = arith.constant 0 : i32
    %c0_i32_0 = arith.constant 0 : i32
    %c0_i32_1 = arith.constant 0 : i32
    return %c0_i32, %c0_i32_0 : i32, i32
  }
  func.func @transform_5(%arg0: i32) -> (i32, i32, i32) {
    %c0_i32 = arith.constant 0 : i32
    %c0_i32_0 = arith.constant 0 : i32
    %c0_i32_1 = arith.constant 0 : i32
    return %arg0, %c0_i32, %c0_i32_0 : i32, i32, i32
  }
}

</mosaic_0001>

<llo_original>
// kernel: image_feature_extractor_forward.1
$region0: #{image_feature_extractor_forward.1}
  #allocation0 [shape = 'u32[]', space=smem, size = 0x4, offset = 0x4, fixed_abs, tag = 'smem constant byte address 0x4 - core index']
  #allocation1 [shape = 'u32[144,128]{1,0:T(1,128)}', space=vmem, size = 0x12000, scoped, tag = 'internal scratch']
  #allocation2 [shape = 'bf16[1,32,2304]{2,1,0:T(16,128)(2,1)}', space=vmem, size = 0x24000, scoped, tag = 'scratch operand']
  %s0 = inlined_call_operand.vmem [shape: bf16[2,384,128], index: 0, kind: input, shape index: {}]
  %s1 = inlined_call_operand.vmem [shape: bf16[128,128], index: 1, kind: input, shape index: {}]
  %s2 = inlined_call_operand.vmem [shape: f32[1,128], index: 2, kind: input, shape index: {}]
  %s3 = inlined_call_operand.vmem [shape: bf16[2304,128], index: 3, kind: input, shape index: {}]
  %s4 = inlined_call_operand.vmem [shape: f32[1,128], index: 4, kind: input, shape index: {}]
  %s5 = inlined_call_operand.vmem [shape: f32[2,32,128], index: 5, kind: output, shape index: {}]
  %s6 = sld [smem:[#allocation0]]
  $region53: #{image_feature_extractor_forward.1} parent=0
    _
  %s8 = ssub.s32 1, %s6
  %s9 = scalar_select 0, %s8, %s6
  loop: start=0, step=1, limit=4
  $region2: #{image_feature_extractor_forward.1} parent=0 // loop_pre_header
    _
  $region3: #{image_feature_extractor_forward.1} parent=0 // loop_header
    %s11 = sphi 0, %s15
    %p12 = scmp.ge.s32.totalorder %s11, 4
    %s21 = sphi 0, %s23
    %s24 = sphi 0, %s21
    %s25 = sphi 0, %s24
    %s41 = sphi 0, %s25
    %s45 = sphi 0, %s45
    %s47 = sphi 0, %s45
    %s48 = sphi 0, %s47
    %s62 = sphi 0, %s48
    %s66 = sphi 0, %s66
    %s68 = sphi 0, %s66
    %s69 = sphi 0, %s68
    %s83 = sphi 0, %s69
    %s87 = sphi 0, %s87
    %s89 = sphi 0, %s87
    %s90 = sphi 0, %s89
    %s104 = sphi 0, %s90
    %s108 = sphi 0, %s108
    %s110 = sphi 0, %s108
    %s111 = sphi 0, %s110
    %s125 = sphi 0, %s111
    %s131 = sphi 0, %s133
    %s134 = sphi 0, %s131
    %s135 = sphi 0, %s134
    %s151 = sphi 0, %s135
  $region4: #{image_feature_extractor_forward.1} parent=0 // loop_header_branch
    %14 = sbr.rel (%p12) target = $region8
  $region5: #{image_feature_extractor_forward.1} parent=0 // loop_body
    %s16 = ssub.s32 %s11, 1
    %s17 = ssub.s32 %s11, 2
    %s18 = sadd.s32 %s11, 1
    %s19 = ssub.s32 %s11, %s18
    %p20 = scmp.eq.s32.totalorder %s19, 0
    %s22 = sadd.s32 %s21, 1
    %s23 = scalar_select %p20, %s21, %s22
    %p26 = pneg %p20
    %p27 = scmp.eq.s32.totalorder %s11, 1
    %p28 = por %p26, %p27
    %p29 = scmp.ne.s32.totalorder %s21, %s24
    %p30 = scmp.eq.s32.totalorder %s11, 0
    %p31 = por %p29, %p30
    %p32 = scmp.ne.s32.totalorder %s21, %s24
    %p33 = scmp.eq.s32.totalorder %s16, 1
    %p34 = por %p32, %p33
    %p35 = scmp.ne.s32.totalorder %s24, %s25
    %p36 = scmp.eq.s32.totalorder %s16, 0
    %p37 = por %p35, %p36
    %p38 = scmp.ne.s32.totalorder %s24, %s25
    %p39 = scmp.eq.s32.totalorder %s17, 1
    %p40 = por %p38, %p39
    %p42 = scmp.ne.s32.totalorder %s25, %s41
    %p43 = scmp.eq.s32.totalorder %s17, 0
    %p44 = por %p42, %p43
    %s46 = sadd.s32 %s45, 1
    %p49 = scmp.eq.s32.totalorder %s11, 1
    %p50 = scmp.ne.s32.totalorder %s45, %s47
    %p51 = scmp.eq.s32.totalorder %s11, 0
    %p52 = por %p50, %p51
    %p53 = scmp.ne.s32.totalorder %s45, %s47
    %p54 = scmp.eq.s32.totalorder %s16, 1
    %p55 = por %p53, %p54
    %p56 = scmp.ne.s32.totalorder %s47, %s48
    %p57 = scmp.eq.s32.totalorder %s16, 0
    %p58 = por %p56, %p57
    %p59 = scmp.ne.s32.totalorder %s47, %s48
    %p60 = scmp.eq.s32.totalorder %s17, 1
    %p61 = por %p59, %p60
    %p63 = scmp.ne.s32.totalorder %s48, %s62
    %p64 = scmp.eq.s32.totalorder %s17, 0
    %p65 = por %p63, %p64
    %s67 = sadd.s32 %s66, 1
    %p70 = scmp.eq.s32.totalorder %s11, 1
    %p71 = scmp.ne.s32.totalorder %s66, %s68
    %p72 = scmp.eq.s32.totalorder %s11, 0
    %p73 = por %p71, %p72
    %p74 = scmp.ne.s32.totalorder %s66, %s68
    %p75 = scmp.eq.s32.totalorder %s16, 1
    %p76 = por %p74, %p75
    %p77 = scmp.ne.s32.totalorder %s68, %s69
    %p78 = scmp.eq.s32.totalorder %s16, 0
    %p79 = por %p77, %p78
    %p80 = scmp.ne.s32.totalorder %s68, %s69
    %p81 = scmp.eq.s32.totalorder %s17, 1
    %p82 = por %p80, %p81
    %p84 = scmp.ne.s32.totalorder %s69, %s83
    %p85 = scmp.eq.s32.totalorder %s17, 0
    %p86 = por %p84, %p85
    %s88 = sadd.s32 %s87, 1
    %p91 = scmp.eq.s32.totalorder %s11, 1
    %p92 = scmp.ne.s32.totalorder %s87, %s89
    %p93 = scmp.eq.s32.totalorder %s11, 0
    %p94 = por %p92, %p93
    %p95 = scmp.ne.s32.totalorder %s87, %s89
    %p96 = scmp.eq.s32.totalorder %s16, 1
    %p97 = por %p95, %p96
    %p98 = scmp.ne.s32.totalorder %s89, %s90
    %p99 = scmp.eq.s32.totalorder %s16, 0
    %p100 = por %p98, %p99
    %p101 = scmp.ne.s32.totalorder %s89, %s90
    %p102 = scmp.eq.s32.totalorder %s17, 1
    %p103 = por %p101, %p102
    %p105 = scmp.ne.s32.totalorder %s90, %s104
    %p106 = scmp.eq.s32.totalorder %s17, 0
    %p107 = por %p105, %p106
    %s109 = sadd.s32 %s108, 1
    %p112 = scmp.eq.s32.totalorder %s11, 1
    %p113 = scmp.ne.s32.totalorder %s108, %s110
    %p114 = scmp.eq.s32.totalorder %s11, 0
    %p115 = por %p113, %p114
    %p116 = scmp.ne.s32.totalorder %s108, %s110
    %p117 = scmp.eq.s32.totalorder %s16, 1
    %p118 = por %p116, %p117
    %p119 = scmp.ne.s32.totalorder %s110, %s111
    %p120 = scmp.eq.s32.totalorder %s16, 0
    %p121 = por %p119, %p120
    %p122 = scmp.ne.s32.totalorder %s110, %s111
    %p123 = scmp.eq.s32.totalorder %s17, 1
    %p124 = por %p122, %p123
    %p126 = scmp.ne.s32.totalorder %s111, %s125
    %p127 = scmp.eq.s32.totalorder %s17, 0
    %p128 = por %p126, %p127
    %s129 = ssub.s32 %s11, %s18
    %p130 = scmp.eq.s32.totalorder %s129, 0
    %s132 = sadd.s32 %s131, 1
    %s133 = scalar_select %p130, %s131, %s132
    %p136 = pneg %p130
    %p137 = scmp.eq.s32.totalorder %s11, 1
    %p138 = por %p136, %p137
    %p139 = scmp.ne.s32.totalorder %s131, %s134
    %p140 = scmp.eq.s32.totalorder %s11, 0
    %p141 = por %p139, %p140
    %p142 = scmp.ne.s32.totalorder %s131, %s134
    %p143 = scmp.eq.s32.totalorder %s16, 1
    %p144 = por %p142, %p143
    %p145 = scmp.ne.s32.totalorder %s134, %s135
    %p146 = scmp.eq.s32.totalorder %s16, 0
    %p147 = por %p145, %p146
    %p148 = scmp.ne.s32.totalorder %s134, %s135
    %p149 = scmp.eq.s32.totalorder %s17, 1
    %p150 = por %p148, %p149
    %p152 = scmp.ne.s32.totalorder %s135, %s151
    %p153 = scmp.eq.s32.totalorder %s17, 0
    %p154 = por %p152, %p153
    %p155 = scmp.le.s32.totalorder 1, %s11
    %p156 = scmp.lt.s32.totalorder %s11, 3
    %p157 = pnand %p155, %p156
    %p158 = pneg %p157
    // Predicated region
    $region9: #{image_feature_extractor_forward.1} parent=5 // pred_check
      _
    $region10: #{image_feature_extractor_forward.1} parent=5 // pred_check_branch
      %160 = sbr.rel (%p157) target = $region12
    $region11: #{image_feature_extractor_forward.1} parent=5 // pred_region
      %s161 = ssub.s32 %s11, 1
      // Predicated region
      $region13: #{image_feature_extractor_forward.1} parent=11 // pred_check
        %p162 = pneg %p58
      $region14: #{image_feature_extractor_forward.1} parent=11 // pred_check_branch
        %164 = sbr.rel (%p162) target = $region16
      $region15: #{image_feature_extractor_forward.1} parent=11 // pred_region
        _
      $region16: #{image_feature_extractor_forward.1} parent=11 // pred_fallthru
        _
      // Predicated region
      $region17: #{image_feature_extractor_forward.1} parent=11 // pred_check
        %p165 = pneg %p79
      $region18: #{image_feature_extractor_forward.1} parent=11 // pred_check_branch
        %167 = sbr.rel (%p165) target = $region20
      $region19: #{image_feature_extractor_forward.1} parent=11 // pred_region
        _
      $region20: #{image_feature_extractor_forward.1} parent=11 // pred_fallthru
        _
      // Predicated region
      $region21: #{image_feature_extractor_forward.1} parent=11 // pred_check
        %p168 = pneg %p100
      $region22: #{image_feature_extractor_forward.1} parent=11 // pred_check_branch
        %170 = sbr.rel (%p168) target = $region24
      $region23: #{image_feature_extractor_forward.1} parent=11 // pred_region
        _
      $region24: #{image_feature_extractor_forward.1} parent=11 // pred_fallthru
        _
      // Predicated region
      $region25: #{image_feature_extractor_forward.1} parent=11 // pred_check
        %p171 = pneg %p121
      $region26: #{image_feature_extractor_forward.1} parent=11 // pred_check_branch
        %173 = sbr.rel (%p171) target = $region28
      $region27: #{image_feature_extractor_forward.1} parent=11 // pred_region
        _
      $region28: #{image_feature_extractor_forward.1} parent=11 // pred_fallthru
        _
    $region12: #{image_feature_extractor_forward.1} parent=5 // pred_fallthru
      _
    %p174 = scmp.lt.s32.totalorder %s11, 2
    // Predicated region
    $region29: #{image_feature_extractor_forward.1} parent=5 // pred_check
      %p175 = pneg %p174
    $region30: #{image_feature_extractor_forward.1} parent=5 // pred_check_branch
      %177 = sbr.rel (%p175) target = $region32
    $region31: #{image_feature_extractor_forward.1} parent=5 // pred_region
      // Predicated region
      $region33: #{image_feature_extractor_forward.1} parent=31 // pred_check
        %p178 = pneg %p31
      $region34: #{image_feature_extractor_forward.1} parent=31 // pred_check_branch
        %180 = sbr.rel (%p178) target = $region36
      $region35: #{image_feature_extractor_forward.1} parent=31 // pred_region
        %p181 = scmp.lt.s32.totalorder %s11, 1
        %s182 = scalar_select %p181, %s11, 1
        %s183 = smul.addr %s182, 48
        %s184 = smul.addr %s183, 4
        %s185 = scalar_lea.vmem %s0, %s184
      $region36: #{image_feature_extractor_forward.1} parent=31 // pred_fallthru
        _
    $region32: #{image_feature_extractor_forward.1} parent=5 // pred_fallthru
      _
    %p186 = scmp.le.s32.totalorder 1, %s11
    %p187 = scmp.lt.s32.totalorder %s11, 3
    %p188 = pnand %p186, %p187
    %p189 = pneg %p188
    // Predicated region
    $region37: #{image_feature_extractor_forward.1} parent=5 // pred_check
      _
    $region38: #{image_feature_extractor_forward.1} parent=5 // pred_check_branch
      %191 = sbr.rel (%p188) target = $region40
    $region39: #{image_feature_extractor_forward.1} parent=5 // pred_region
      %s192 = ssub.s32 %s11, 1
      %p193 = scmp.lt.s32.totalorder %s16, 1
      %s194 = scalar_select %p193, %s16, 1
      %s195 = smul.addr %s194, 48
      %s196 = smul.addr %s195, 4
      %s197 = scalar_lea.vmem %s0, %s196
      %p198 = pneg %p37
      %p199 = pneg %p34
      %p200 = pneg %p58
      %p201 = pneg %p55
      %p202 = pneg %p79
      %p203 = pneg %p76
      %p204 = pneg %p100
      %p205 = pneg %p97
      %p206 = pneg %p121
      %p207 = pneg %p118
      %p208 = pneg %p147
      %p209 = pneg %p144
      %p210 = scmp.lt.s32.totalorder %s16, 1
      %s211 = scalar_select %p210, %s16, 1
      %s212 = smul.addr %s211, 4
      %s213 = smul.addr %s212, 8
      %s214 = scalar_lea.vmem %s5, %s213
      %p215 = scmp.lt.s32.totalorder %s16, 1
      %s216 = scalar_select %p215, %s16, 1
      %s217 = smul.addr %s216, 48
      %s218 = smul.addr %s217, 4
      %s219 = scalar_lea.vmem %s0, %s218
      %p220 = scmp.lt.s32.totalorder %s16, 1
      %s221 = scalar_select %p220, %s16, 1
      %s222 = smul.addr %s221, 4
      %s223 = smul.addr %s222, 8
      %s224 = scalar_lea.vmem %s5, %s223
      %v226 = vlaneseq
      %v227 = vshrl.u32 %v226, 7
      %v228 = vadd.s32 %v227, 8
      %v229 = vadd.s32 %v227, 16
      %v230 = vadd.s32 %v227, 24
      %v231 = vadd.s32 %v227, 32
      %v232 = vadd.s32 %v227, 40
      %v233 = vadd.s32 %v227, 48
      %v234 = vadd.s32 %v227, 56
      %vm235 = vcmp.lt.s32.totalorder %v227, 0
      %v236 = vsub.s32 0, %v227
      %v237 = vsel %vm235, %v236, %v227
      %v238 = vshrl.u32 %v237, 3
      %v239 = vand.u32 %v237, 7
      %v240 = vsub.s32 0, %v239
      %v241 = vsel %vm235, %v240, %v239
      %vm242 = vcmp.lt.s32.totalorder %v228, 0
      %v243 = vsub.s32 0, %v228
      %v244 = vsel %vm242, %v243, %v228
      %v245 = vshrl.u32 %v244, 3
      %v246 = vand.u32 %v244, 7
      %v247 = vsub.s32 0, %v246
      %v248 = vsel %vm242, %v247, %v246
      %vm249 = vcmp.lt.s32.totalorder %v229, 0
      %v250 = vsub.s32 0, %v229
      %v251 = vsel %vm249, %v250, %v229
      %v252 = vshrl.u32 %v251, 3
      %v253 = vand.u32 %v251, 7
      %v254 = vsub.s32 0, %v253
      %v255 = vsel %vm249, %v254, %v253
      %vm256 = vcmp.lt.s32.totalorder %v230, 0
      %v257 = vsub.s32 0, %v230
      %v258 = vsel %vm256, %v257, %v230
      %v259 = vshrl.u32 %v258, 3
      %v260 = vand.u32 %v258, 7
      %v261 = vsub.s32 0, %v260
      %v262 = vsel %vm256, %v261, %v260
      %vm263 = vcmp.lt.s32.totalorder %v231, 0
      %v264 = vsub.s32 0, %v231
      %v265 = vsel %vm263, %v264, %v231
      %v266 = vshrl.u32 %v265, 3
      %v267 = vand.u32 %v265, 7
      %v268 = vsub.s32 0, %v267
      %v269 = vsel %vm263, %v268, %v267
      %vm270 = vcmp.lt.s32.totalorder %v232, 0
      %v271 = vsub.s32 0, %v232
      %v272 = vsel %vm270, %v271, %v232
      %v273 = vshrl.u32 %v272, 3
      %v274 = vand.u32 %v272, 7
      %v275 = vsub.s32 0, %v274
      %v276 = vsel %vm270, %v275, %v274
      %vm277 = vcmp.lt.s32.totalorder %v233, 0
      %v278 = vsub.s32 0, %v233
      %v279 = vsel %vm277, %v278, %v233
      %v280 = vshrl.u32 %v279, 3
      %v281 = vand.u32 %v279, 7
      %v282 = vsub.s32 0, %v281
      %v283 = vsel %vm277, %v282, %v281
      %vm284 = vcmp.lt.s32.totalorder %v234, 0
      %v285 = vsub.s32 0, %v234
      %v286 = vsel %vm284, %v285, %v234
      %v287 = vshrl.u32 %v286, 3
      %v288 = vand.u32 %v286, 7
      %v289 = vsub.s32 0, %v288
      %v290 = vsel %vm284, %v289, %v288
      %vm291 = vcmp.ne.s32.totalorder %v241, 0
      %vm292 = vcmp.ne.s32.totalorder %v248, 0
      %vm293 = vcmp.ne.s32.totalorder %v255, 0
      %vm294 = vcmp.ne.s32.totalorder %v262, 0
      %vm295 = vcmp.ne.s32.totalorder %v269, 0
      %vm296 = vcmp.ne.s32.totalorder %v276, 0
      %vm297 = vcmp.ne.s32.totalorder %v283, 0
      %vm298 = vcmp.ne.s32.totalorder %v290, 0
      %vm299 = vcmp.lt.s32.totalorder %v241, 0
      %vm300 = vcmp.lt.s32.totalorder %v248, 0
      %vm301 = vcmp.lt.s32.totalorder %v255, 0
      %vm302 = vcmp.lt.s32.totalorder %v262, 0
      %vm303 = vcmp.lt.s32.totalorder %v269, 0
      %vm304 = vcmp.lt.s32.totalorder %v276, 0
      %vm305 = vcmp.lt.s32.totalorder %v283, 0
      %vm306 = vcmp.lt.s32.totalorder %v290, 0
      %vm307 = vmand %vm299, %vm291
      %vm308 = vmand %vm300, %vm292
      %vm309 = vmand %vm301, %vm293
      %vm310 = vmand %vm302, %vm294
      %vm311 = vmand %vm303, %vm295
      %vm312 = vmand %vm304, %vm296
      %vm313 = vmand %vm305, %vm297
      %vm314 = vmand %vm306, %vm298
      %v315 = vadd.s32 %v241, 8
      %v316 = vadd.s32 %v248, 8
      %v317 = vadd.s32 %v255, 8
      %v318 = vadd.s32 %v262, 8
      %v319 = vadd.s32 %v269, 8
      %v320 = vadd.s32 %v276, 8
      %v321 = vadd.s32 %v283, 8
      %v322 = vadd.s32 %v290, 8
      %v323 = vsel %vm307, %v315, %v241
      %v324 = vsel %vm308, %v316, %v248
      %v325 = vsel %vm309, %v317, %v255
      %v326 = vsel %vm310, %v318, %v262
      %v327 = vsel %vm311, %v319, %v269
      %v328 = vsel %vm312, %v320, %v276
      %v329 = vsel %vm313, %v321, %v283
      %v330 = vsel %vm314, %v322, %v290
      %vm331 = vcmp.eq.s32.totalorder %v323, 0
      %vm332 = vcmp.eq.s32.totalorder %v324, 0
      %vm333 = vcmp.eq.s32.totalorder %v325, 0
      %vm334 = vcmp.eq.s32.totalorder %v326, 0
      %vm335 = vcmp.eq.s32.totalorder %v327, 0
      %vm336 = vcmp.eq.s32.totalorder %v328, 0
      %vm337 = vcmp.eq.s32.totalorder %v329, 0
      %vm338 = vcmp.eq.s32.totalorder %v330, 0
      %v339 = vld [vmem:[%s1] sm:$0xf]
      %v340 = vld [vmem:[%s1 + $0x4] sm:$0xf]
      %v341 = vld [vmem:[%s1 + $0x8] sm:$0xf]
      %v342 = vld [vmem:[%s1 + $0xc] sm:$0xf]
      %v343 = vld [vmem:[%s1 + $0x10] sm:$0xf]
      %v344 = vld [vmem:[%s1 + $0x14] sm:$0xf]
      %v345 = vld [vmem:[%s1 + $0x18] sm:$0xf]
      %v346 = vld [vmem:[%s1 + $0x1c] sm:$0xf]
      %v347 = vld [vmem:[%s1 + $0x20] sm:$0xf]
      %v348 = vld [vmem:[%s1 + $0x24] sm:$0xf]
      %v349 = vld [vmem:[%s1 + $0x28] sm:$0xf]
      %v350 = vld [vmem:[%s1 + $0x2c] sm:$0xf]
      %v351 = vld [vmem:[%s1 + $0x30] sm:$0xf]
      %v352 = vld [vmem:[%s1 + $0x34] sm:$0xf]
      %v353 = vld [vmem:[%s1 + $0x38] sm:$0xf]
      %v354 = vld [vmem:[%s1 + $0x3c] sm:$0xf]
      %v355 = vld [vmem:[%s2] sm:$0x1]
      %v356 = vld [vmem:[%s219] sm:$0xf]
      %v357 = vld [vmem:[%s219 + $0x4] sm:$0xf]
      %v358 = vld [vmem:[%s219 + $0x8] sm:$0xf]
      %v359 = vld [vmem:[%s219 + $0xc] sm:$0xf]
      %v360 = vld [vmem:[%s219 + $0x10] sm:$0xf]
      %v361 = vld [vmem:[%s219 + $0x14] sm:$0xf]
      %v362 = vld [vmem:[%s219 + $0x18] sm:$0xf]
      %v363 = vld [vmem:[%s219 + $0x1c] sm:$0xf]
      %v364 = vld [vmem:[%s219 + $0x20] sm:$0xf]
      %v365 = vld [vmem:[%s219 + $0x24] sm:$0xf]
      %v366 = vld [vmem:[%s219 + $0x28] sm:$0xf]
      %v367 = vld [vmem:[%s219 + $0x2c] sm:$0xf]
      %v368 = vld [vmem:[%s219 + $0x30] sm:$0xf]
      %v369 = vld [vmem:[%s219 + $0x34] sm:$0xf]
      %v370 = vld [vmem:[%s219 + $0x38] sm:$0xf]
      %v371 = vld [vmem:[%s219 + $0x3c] sm:$0xf]
      %v372 = vld [vmem:[%s219 + $0x40] sm:$0xf]
      %v373 = vld [vmem:[%s219 + $0x44] sm:$0xf]
      %v374 = vld [vmem:[%s219 + $0x48] sm:$0xf]
      %v375 = vld [vmem:[%s219 + $0x4c] sm:$0xf]
      %v376 = vld [vmem:[%s219 + $0x50] sm:$0xf]
      %v377 = vld [vmem:[%s219 + $0x54] sm:$0xf]
      %v378 = vld [vmem:[%s219 + $0x58] sm:$0xf]
      %v379 = vld [vmem:[%s219 + $0x5c] sm:$0xf]
      %v380 = vld [vmem:[%s219 + $0x60] sm:$0xf]
      %v381 = vld [vmem:[%s219 + $0x64] sm:$0xf]
      %v382 = vld [vmem:[%s219 + $0x68] sm:$0xf]
      %v383 = vld [vmem:[%s219 + $0x6c] sm:$0xf]
      %v384 = vld [vmem:[%s219 + $0x70] sm:$0xf]
      %v385 = vld [vmem:[%s219 + $0x74] sm:$0xf]
      %v386 = vld [vmem:[%s219 + $0x78] sm:$0xf]
      %v387 = vld [vmem:[%s219 + $0x7c] sm:$0xf]
      %v388 = vld [vmem:[%s219 + $0x80] sm:$0xf]
      %v389 = vld [vmem:[%s219 + $0x84] sm:$0xf]
      %v390 = vld [vmem:[%s219 + $0x88] sm:$0xf]
      %v391 = vld [vmem:[%s219 + $0x8c] sm:$0xf]
      %v392 = vld [vmem:[%s219 + $0x90] sm:$0xf]
      %v393 = vld [vmem:[%s219 + $0x94] sm:$0xf]
      %v394 = vld [vmem:[%s219 + $0x98] sm:$0xf]
      %v395 = vld [vmem:[%s219 + $0x9c] sm:$0xf]
      %v396 = vld [vmem:[%s219 + $0xa0] sm:$0xf]
      %v397 = vld [vmem:[%s219 + $0xa4] sm:$0xf]
      %v398 = vld [vmem:[%s219 + $0xa8] sm:$0xf]
      %v399 = vld [vmem:[%s219 + $0xac] sm:$0xf]
      %v400 = vld [vmem:[%s219 + $0xb0] sm:$0xf]
      %v401 = vld [vmem:[%s219 + $0xb4] sm:$0xf]
      %v402 = vld [vmem:[%s219 + $0xb8] sm:$0xf]
      %v403 = vld [vmem:[%s219 + $0xbc] sm:$0xf]
      %v405 = vlaneseq
      %v406 = vshrl.u32 %v405, 7
      %v407 = vsub.s32 0, %v406
      %v408 = vrot.slane %v355, %v407
      %v458 = vunpack.c.l.b16 %v356
      %v459 = vunpack.c.l.b16 %v357
      %v460 = vunpack.c.l.b16 %v358
      %v461 = vunpack.c.l.b16 %v359
      %v462 = vunpack.c.l.b16 %v360
      %v463 = vunpack.c.l.b16 %v361
      %v464 = vunpack.c.l.b16 %v362
      %v465 = vunpack.c.l.b16 %v363
      %v466 = vunpack.c.l.b16 %v364
      %v467 = vunpack.c.l.b16 %v365
      %v468 = vunpack.c.l.b16 %v366
      %v469 = vunpack.c.l.b16 %v367
      %v470 = vunpack.c.l.b16 %v368
      %v471 = vunpack.c.l.b16 %v369
      %v472 = vunpack.c.l.b16 %v370
      %v473 = vunpack.c.l.b16 %v371
      %v474 = vunpack.c.l.b16 %v372
      %v475 = vunpack.c.l.b16 %v373
      %v476 = vunpack.c.l.b16 %v374
      %v477 = vunpack.c.l.b16 %v375
      %v478 = vunpack.c.l.b16 %v376
      %v479 = vunpack.c.l.b16 %v377
      %v480 = vunpack.c.l.b16 %v378
      %v481 = vunpack.c.l.b16 %v379
      %v482 = vunpack.c.l.b16 %v380
      %v483 = vunpack.c.l.b16 %v381
      %v484 = vunpack.c.l.b16 %v382
      %v485 = vunpack.c.l.b16 %v383
      %v486 = vunpack.c.l.b16 %v384
      %v487 = vunpack.c.l.b16 %v385
      %v488 = vunpack.c.l.b16 %v386
      %v489 = vunpack.c.l.b16 %v387
      %v490 = vunpack.c.l.b16 %v388
      %v491 = vunpack.c.l.b16 %v389
      %v492 = vunpack.c.l.b16 %v390
      %v493 = vunpack.c.l.b16 %v391
      %v494 = vunpack.c.l.b16 %v392
      %v495 = vunpack.c.l.b16 %v393
      %v496 = vunpack.c.l.b16 %v394
      %v497 = vunpack.c.l.b16 %v395
      %v498 = vunpack.c.l.b16 %v396
      %v499 = vunpack.c.l.b16 %v397
      %v500 = vunpack.c.l.b16 %v398
      %v501 = vunpack.c.l.b16 %v399
      %v502 = vunpack.c.l.b16 %v400
      %v503 = vunpack.c.l.b16 %v401
      %v504 = vunpack.c.l.b16 %v402
      %v505 = vunpack.c.l.b16 %v403
      %v506 = vpack.c.b16 %v459, %v458
      %v507 = vpack.c.b16 %v461, %v460
      %v508 = vpack.c.b16 %v463, %v462
      %v509 = vpack.c.b16 %v465, %v464
      %v510 = vpack.c.b16 %v467, %v466
      %v511 = vpack.c.b16 %v469, %v468
      %v512 = vpack.c.b16 %v471, %v470
      %v513 = vpack.c.b16 %v473, %v472
      %v514 = vpack.c.b16 %v475, %v474
      %v515 = vpack.c.b16 %v477, %v476
      %v516 = vpack.c.b16 %v479, %v478
      %v517 = vpack.c.b16 %v481, %v480
      %v518 = vpack.c.b16 %v483, %v482
      %v519 = vpack.c.b16 %v485, %v484
      %v520 = vpack.c.b16 %v487, %v486
      %v521 = vpack.c.b16 %v489, %v488
      %v522 = vpack.c.b16 %v491, %v490
      %v523 = vpack.c.b16 %v493, %v492
      %v524 = vpack.c.b16 %v495, %v494
      %v525 = vpack.c.b16 %v497, %v496
      %v526 = vpack.c.b16 %v499, %v498
      %v527 = vpack.c.b16 %v501, %v500
      %v528 = vpack.c.b16 %v503, %v502
      %v529 = vpack.c.b16 %v505, %v504
      %v570 = vunpack.c.l.b16 %v339
      %v571 = vunpack.c.l.b16 %v340
      %v572 = vunpack.c.l.b16 %v341
      %v573 = vunpack.c.l.b16 %v342
      %v574 = vunpack.c.l.b16 %v343
      %v575 = vunpack.c.l.b16 %v344
      %v576 = vunpack.c.l.b16 %v345
      %v577 = vunpack.c.l.b16 %v346
      %v578 = vunpack.c.l.b16 %v347
      %v579 = vunpack.c.l.b16 %v348
      %v580 = vunpack.c.l.b16 %v349
      %v581 = vunpack.c.l.b16 %v350
      %v582 = vunpack.c.l.b16 %v351
      %v583 = vunpack.c.l.b16 %v352
      %v584 = vunpack.c.l.b16 %v353
      %v585 = vunpack.c.l.b16 %v354
      %v586 = vpack.c.b16 %v571, %v570
      %v587 = vpack.c.b16 %v573, %v572
      %v588 = vpack.c.b16 %v575, %v574
      %v589 = vpack.c.b16 %v577, %v576
      %v590 = vpack.c.b16 %v579, %v578
      %v591 = vpack.c.b16 %v581, %v580
      %v592 = vpack.c.b16 %v583, %v582
      %v593 = vpack.c.b16 %v585, %v584
      %602 = vmatprep.subr.bf16.mxu0 0
      %603 = vmatpush1.bf16.msra.mxu0 %v586
      %604 = vmatprep.subr.bf16.mxu0 0
      %605 = vmatpush1.bf16.msra.mxu0 %v587
      %606 = vmatprep.subr.bf16.mxu0 0
      %607 = vmatpush1.bf16.msra.mxu0 %v588
      %608 = vmatprep.subr.bf16.mxu0 0
      %609 = vmatpush1.bf16.msra.mxu0 %v589
      %610 = vmatprep.subr.bf16.mxu0 0
      %611 = vmatpush1.bf16.msra.mxu0 %v590
      %612 = vmatprep.subr.bf16.mxu0 0
      %613 = vmatpush1.bf16.msra.mxu0 %v591
      %614 = vmatprep.subr.bf16.mxu0 0
      %615 = vmatpush1.bf16.msra.mxu0 %v592
      %616 = vmatprep.subr.bf16.mxu0 0
      %617 = vmatpush1.bf16.msra.mxu0 %v593
      %618 = vmatprep.subr.bf16.mxu0 0
      %619 = vmatpush1.bf16.msra.mxu0 0
      %620 = vmatprep.subr.bf16.mxu0 0
      %621 = vmatpush1.bf16.msra.mxu0 0
      %622 = vmatprep.subr.bf16.mxu0 0
      %623 = vmatpush1.bf16.msra.mxu0 0
      %624 = vmatprep.subr.bf16.mxu0 0
      %625 = vmatpush1.bf16.msra.mxu0 0
      %626 = vmatprep.subr.bf16.mxu0 0
      %627 = vmatpush1.bf16.msra.mxu0 0
      %628 = vmatprep.subr.bf16.mxu0 0
      %629 = vmatpush1.bf16.msra.mxu0 0
      %630 = vmatprep.subr.bf16.mxu0 0
      %631 = vmatpush1.bf16.msra.mxu0 0
      %632 = vmatprep.subr.bf16.mxu0 0
      %633 = vmatpush1.bf16.msra.mxu0 0
      %634 = vmatprep.mubr.bf16.mxu0 0
      %635 = vmatmul.mubr.bf16.gmra.mrb[0].mxu0 %v506
      %v636 = vpop.f32.mrb[0].mxu0
      %v637 = vadd.f32 %v408, %v636
      %v638 = vpop.f32.mrb[0].mxu0
      %v639 = vpop.f32.mrb[0].mxu0
      %v640 = vadd.f32 %v408, %v639
      %v641 = vpop.f32.mrb[0].mxu0
      %642 = vmatprep.mubr.bf16.mxu0 0
      %643 = vmatmul.mubr.bf16.gmra.mrb[0].mxu0 %v507
      %v644 = vpop.f32.mrb[0].mxu0
      %v645 = vadd.f32 %v408, %v644
      %v646 = vpop.f32.mrb[0].mxu0
      %v647 = vpop.f32.mrb[0].mxu0
      %v648 = vadd.f32 %v408, %v647
      %v649 = vpop.f32.mrb[0].mxu0
      %650 = vmatprep.mubr.bf16.mxu0 0
      %651 = vmatmul.mubr.bf16.gmra.mrb[0].mxu0 %v508
      %v652 = vpop.f32.mrb[0].mxu0
      %v653 = vadd.f32 %v408, %v652
      %v654 = vpop.f32.mrb[0].mxu0
      %v655 = vpop.f32.mrb[0].mxu0
      %v656 = vadd.f32 %v408, %v655
      %v657 = vpop.f32.mrb[0].mxu0
      %658 = vmatprep.mubr.bf16.mxu0 0
      %659 = vmatmul.mubr.bf16.gmra.mrb[0].mxu0 %v509
      %v660 = vpop.f32.mrb[0].mxu0
      %v661 = vadd.f32 %v408, %v660
      %v662 = vpop.f32.mrb[0].mxu0
      %v663 = vpop.f32.mrb[0].mxu0
      %v664 = vadd.f32 %v408, %v663
      %v665 = vpop.f32.mrb[0].mxu0
      %666 = vmatprep.mubr.bf16.mxu0 0
      %667 = vmatmul.mubr.bf16.gmra.mrb[0].mxu0 %v510
      %v668 = vpop.f32.mrb[0].mxu0
      %v669 = vadd.f32 %v408, %v668
      %v670 = vpop.f32.mrb[0].mxu0
      %v671 = vpop.f32.mrb[0].mxu0
      %v672 = vadd.f32 %v408, %v671
      %v673 = vpop.f32.mrb[0].mxu0
      %674 = vmatprep.mubr.bf16.mxu0 0
      %675 = vmatmul.mubr.bf16.gmra.mrb[0].mxu0 %v511
      %v676 = vpop.f32.mrb[0].mxu0
      %v677 = vadd.f32 %v408, %v676
      %v678 = vpop.f32.mrb[0].mxu0
      %v679 = vpop.f32.mrb[0].mxu0
      %v680 = vadd.f32 %v408, %v679
      %v681 = vpop.f32.mrb[0].mxu0
      %682 = vmatprep.mubr.bf16.mxu0 0
      %683 = vmatmul.mubr.bf16.gmra.mrb[0].mxu0 %v512
      %v684 = vpop.f32.mrb[0].mxu0
      %v685 = vadd.f32 %v408, %v684
      %v686 = vpop.f32.mrb[0].mxu0
      %v687 = vpop.f32.mrb[0].mxu0
      %v688 = vadd.f32 %v408, %v687
      %v689 = vpop.f32.mrb[0].mxu0
      %690 = vmatprep.mubr.bf16.mxu0 0
      %691 = vmatmul.mubr.bf16.gmra.mrb[0].mxu0 %v513
      %v692 = vpop.f32.mrb[0].mxu0
      %v693 = vadd.f32 %v408, %v692
      %v694 = vpop.f32.mrb[0].mxu0
      %v695 = vpop.f32.mrb[0].mxu0
      %v696 = vadd.f32 %v408, %v695
      %v697 = vpop.f32.mrb[0].mxu0
      %698 = vmatprep.mubr.bf16.mxu0 0
      %699 = vmatmul.mubr.bf16.gmra.mrb[0].mxu0 %v514
      %v700 = vpop.f32.mrb[0].mxu0
      %v701 = vadd.f32 %v408, %v700
      %v702 = vpop.f32.mrb[0].mxu0
      %v703 = vpop.f32.mrb[0].mxu0
      %v704 = vadd.f32 %v408, %v703
      %v705 = vpop.f32.mrb[0].mxu0
      %706 = vmatprep.mubr.bf16.mxu0 0
      %707 = vmatmul.mubr.bf16.gmra.mrb[0].mxu0 %v515
      %v708 = vpop.f32.mrb[0].mxu0
      %v709 = vadd.f32 %v408, %v708
      %v710 = vpop.f32.mrb[0].mxu0
      %v711 = vpop.f32.mrb[0].mxu0
      %v712 = vadd.f32 %v408, %v711
      %v713 = vpop.f32.mrb[0].mxu0
      %714 = vmatprep.mubr.bf16.mxu0 0
      %715 = vmatmul.mubr.bf16.gmra.mrb[0].mxu0 %v516
      %v716 = vpop.f32.mrb[0].mxu0
      %v717 = vadd.f32 %v408, %v716
      %v718 = vpop.f32.mrb[0].mxu0
      %v719 = vpop.f32.mrb[0].mxu0
      %v720 = vadd.f32 %v408, %v719
      %v721 = vpop.f32.mrb[0].mxu0
      %722 = vmatprep.mubr.bf16.mxu0 0
      %723 = vmatmul.mubr.bf16.gmra.mrb[0].mxu0 %v517
      %v724 = vpop.f32.mrb[0].mxu0
      %v725 = vadd.f32 %v408, %v724
      %v726 = vpop.f32.mrb[0].mxu0
      %v727 = vpop.f32.mrb[0].mxu0
      %v728 = vadd.f32 %v408, %v727
      %v729 = vpop.f32.mrb[0].mxu0
      %730 = vmatprep.mubr.bf16.mxu0 0
      %731 = vmatmul.mubr.bf16.gmra.mrb[0].mxu0 %v518
      %v732 = vpop.f32.mrb[0].mxu0
      %v733 = vadd.f32 %v408, %v732
      %v734 = vpop.f32.mrb[0].mxu0
      %v735 = vpop.f32.mrb[0].mxu0
      %v736 = vadd.f32 %v408, %v735
      %v737 = vpop.f32.mrb[0].mxu0
      %738 = vmatprep.mubr.bf16.mxu0 0
      %739 = vmatmul.mubr.bf16.gmra.mrb[0].mxu0 %v519
      %v740 = vpop.f32.mrb[0].mxu0
      %v741 = vadd.f32 %v408, %v740
      %v742 = vpop.f32.mrb[0].mxu0
      %v743 = vpop.f32.mrb[0].mxu0
      %v744 = vadd.f32 %v408, %v743
      %v745 = vpop.f32.mrb[0].mxu0
      %746 = vmatprep.mubr.bf16.mxu0 0
      %747 = vmatmul.mubr.bf16.gmra.mrb[0].mxu0 %v520
      %v748 = vpop.f32.mrb[0].mxu0
      %v749 = vadd.f32 %v408, %v748
      %v750 = vpop.f32.mrb[0].mxu0
      %v751 = vpop.f32.mrb[0].mxu0
      %v752 = vadd.f32 %v408, %v751
      %v753 = vpop.f32.mrb[0].mxu0
      %754 = vmatprep.mubr.bf16.mxu0 0
      %755 = vmatmul.mubr.bf16.gmra.mrb[0].mxu0 %v521
      %v756 = vpop.f32.mrb[0].mxu0
      %v757 = vadd.f32 %v408, %v756
      %v758 = vpop.f32.mrb[0].mxu0
      %v759 = vpop.f32.mrb[0].mxu0
      %v760 = vadd.f32 %v408, %v759
      %v761 = vpop.f32.mrb[0].mxu0
      %762 = vmatprep.mubr.bf16.mxu0 0
      %763 = vmatmul.mubr.bf16.gmra.mrb[0].mxu0 %v522
      %v764 = vpop.f32.mrb[0].mxu0
      %v765 = vadd.f32 %v408, %v764
      %v766 = vpop.f32.mrb[0].mxu0
      %v767 = vpop.f32.mrb[0].mxu0
      %v768 = vadd.f32 %v408, %v767
      %v769 = vpop.f32.mrb[0].mxu0
      %770 = vmatprep.mubr.bf16.mxu0 0
      %771 = vmatmul.mubr.bf16.gmra.mrb[0].mxu0 %v523
      %v772 = vpop.f32.mrb[0].mxu0
      %v773 = vadd.f32 %v408, %v772
      %v774 = vpop.f32.mrb[0].mxu0
      %v775 = vpop.f32.mrb[0].mxu0
      %v776 = vadd.f32 %v408, %v775
      %v777 = vpop.f32.mrb[0].mxu0
      %778 = vmatprep.mubr.bf16.mxu0 0
      %779 = vmatmul.mubr.bf16.gmra.mrb[0].mxu0 %v524
      %v780 = vpop.f32.mrb[0].mxu0
      %v781 = vadd.f32 %v408, %v780
      %v782 = vpop.f32.mrb[0].mxu0
      %v783 = vpop.f32.mrb[0].mxu0
      %v784 = vadd.f32 %v408, %v783
      %v785 = vpop.f32.mrb[0].mxu0
      %786 = vmatprep.mubr.bf16.mxu0 0
      %787 = vmatmul.mubr.bf16.gmra.mrb[0].mxu0 %v525
      %v788 = vpop.f32.mrb[0].mxu0
      %v789 = vadd.f32 %v408, %v788
      %v790 = vpop.f32.mrb[0].mxu0
      %v791 = vpop.f32.mrb[0].mxu0
      %v792 = vadd.f32 %v408, %v791
      %v793 = vpop.f32.mrb[0].mxu0
      %794 = vmatprep.mubr.bf16.mxu0 0
      %795 = vmatmul.mubr.bf16.gmra.mrb[0].mxu0 %v526
      %v796 = vpop.f32.mrb[0].mxu0
      %v797 = vadd.f32 %v408, %v796
      %v798 = vpop.f32.mrb[0].mxu0
      %v799 = vpop.f32.mrb[0].mxu0
      %v800 = vadd.f32 %v408, %v799
      %v801 = vpop.f32.mrb[0].mxu0
      %802 = vmatprep.mubr.bf16.mxu0 0
      %803 = vmatmul.mubr.bf16.gmra.mrb[0].mxu0 %v527
      %v804 = vpop.f32.mrb[0].mxu0
      %v805 = vadd.f32 %v408, %v804
      %v806 = vpop.f32.mrb[0].mxu0
      %v807 = vpop.f32.mrb[0].mxu0
      %v808 = vadd.f32 %v408, %v807
      %v809 = vpop.f32.mrb[0].mxu0
      %810 = vmatprep.mubr.bf16.mxu0 0
      %811 = vmatmul.mubr.bf16.gmra.mrb[0].mxu0 %v528
      %v812 = vpop.f32.mrb[0].mxu0
      %v813 = vadd.f32 %v408, %v812
      %v814 = vpop.f32.mrb[0].mxu0
      %v815 = vpop.f32.mrb[0].mxu0
      %v816 = vadd.f32 %v408, %v815
      %v817 = vpop.f32.mrb[0].mxu0
      %818 = vmatprep.mubr.bf16.mxu0 0
      %819 = vmatmul.mubr.bf16.gmra.mrb[0].mxu0 %v529
      %v820 = vpop.f32.mrb[0].mxu0
      %v821 = vadd.f32 %v408, %v820
      %v822 = vpop.f32.mrb[0].mxu0
      %v823 = vpop.f32.mrb[0].mxu0
      %v824 = vadd.f32 %v408, %v823
      %v825 = vpop.f32.mrb[0].mxu0
      %826 = vdwg.mxu0
      %v827 = vmax.f32 %v637, 0.0
      %v828 = vmax.f32 %v640, 0.0
      %v829 = vmax.f32 %v645, 0.0
      %v830 = vmax.f32 %v648, 0.0
      %v831 = vmax.f32 %v653, 0.0
      %v832 = vmax.f32 %v656, 0.0
      %v833 = vmax.f32 %v661, 0.0
      %v834 = vmax.f32 %v664, 0.0
      %v835 = vmax.f32 %v669, 0.0
      %v836 = vmax.f32 %v672, 0.0
      %v837 = vmax.f32 %v677, 0.0
      %v838 = vmax.f32 %v680, 0.0
      %v839 = vmax.f32 %v685, 0.0
      %v840 = vmax.f32 %v688, 0.0
      %v841 = vmax.f32 %v693, 0.0
      %v842 = vmax.f32 %v696, 0.0
      %v843 = vmax.f32 %v701, 0.0
      %v844 = vmax.f32 %v704, 0.0
      %v845 = vmax.f32 %v709, 0.0
      %v846 = vmax.f32 %v712, 0.0
      %v847 = vmax.f32 %v717, 0.0
      %v848 = vmax.f32 %v720, 0.0
      %v849 = vmax.f32 %v725, 0.0
      %v850 = vmax.f32 %v728, 0.0
      %v851 = vmax.f32 %v733, 0.0
      %v852 = vmax.f32 %v736, 0.0
      %v853 = vmax.f32 %v741, 0.0
      %v854 = vmax.f32 %v744, 0.0
      %v855 = vmax.f32 %v749, 0.0
      %v856 = vmax.f32 %v752, 0.0
      %v857 = vmax.f32 %v757, 0.0
      %v858 = vmax.f32 %v760, 0.0
      %v859 = vmax.f32 %v765, 0.0
      %v860 = vmax.f32 %v768, 0.0
      %v861 = vmax.f32 %v773, 0.0
      %v862 = vmax.f32 %v776, 0.0
      %v863 = vmax.f32 %v781, 0.0
      %v864 = vmax.f32 %v784, 0.0
      %v865 = vmax.f32 %v789, 0.0
      %v866 = vmax.f32 %v792, 0.0
      %v867 = vmax.f32 %v797, 0.0
      %v868 = vmax.f32 %v800, 0.0
      %v869 = vmax.f32 %v805, 0.0
      %v870 = vmax.f32 %v808, 0.0
      %v871 = vmax.f32 %v813, 0.0
      %v872 = vmax.f32 %v816, 0.0
      %v873 = vmax.f32 %v821, 0.0
      %v874 = vmax.f32 %v824, 0.0
      %v875 = vsel %vm331, 0.0, %v859
      %v876 = vsel %vm332, 0.0, %v860
      %v877 = vsel %vm333, 0.0, %v861
      %v878 = vsel %vm334, 0.0, %v862
      %v879 = vsel %vm335, 0.0, %v863
      %v880 = vsel %vm336, 0.0, %v864
      %v881 = vsel %vm337, 0.0, %v865
      %v882 = vsel %vm338, 0.0, %v866
      %v883 = vsel %vm331, 0.0, %v867
      %v884 = vsel %vm332, 0.0, %v868
      %v885 = vsel %vm333, 0.0, %v869
      %v886 = vsel %vm334, 0.0, %v870
      %v887 = vsel %vm335, 0.0, %v871
      %v888 = vsel %vm336, 0.0, %v872
      %v889 = vsel %vm337, 0.0, %v873
      %v890 = vsel %vm338, 0.0, %v874
      %v891 = vpack.c.bf16 %v883, 0.0
      %v892 = vpack.c.bf16 %v843, 0.0
      %v893 = vpack.c.bf16 %v851, 0.0
      %v894 = vpack.c.bf16 %v876, %v875
      %v895 = vpack.c.bf16 %v828, %v827
      %v896 = vpack.c.bf16 %v836, %v835
      %v897 = vpack.c.bf16 %v884, %v883
      %v898 = vpack.c.bf16 %v844, %v843
      %v899 = vpack.c.bf16 %v852, %v851
      %v900 = vpack.c.bf16 %v887, %v886
      %v901 = vpack.c.bf16 %v847, %v846
      %v902 = vpack.c.bf16 %v855, %v854
      %v903 = vpack.c.bf16 %v880, %v879
      %v904 = vpack.c.bf16 %v832, %v831
      %v905 = vpack.c.bf16 %v840, %v839
      %v906 = vpack.c.bf16 %v888, %v887
      %v907 = vpack.c.bf16 %v848, %v847
      %v908 = vpack.c.bf16 %v856, %v855
      %v909 = vpack.c.bf16 %v885, %v884
      %v910 = vpack.c.bf16 %v845, %v844
      %v911 = vpack.c.bf16 %v853, %v852
      %v912 = vpack.c.bf16 %v878, %v877
      %v913 = vpack.c.bf16 %v830, %v829
      %v914 = vpack.c.bf16 %v838, %v837
      %v915 = vpack.c.bf16 %v886, %v885
      %v916 = vpack.c.bf16 %v846, %v845
      %v917 = vpack.c.bf16 %v854, %v853
      %v918 = vpack.c.bf16 %v889, %v888
      %v919 = vpack.c.bf16 %v849, %v848
      %v920 = vpack.c.bf16 %v857, %v856
      %v921 = vpack.c.bf16 %v882, %v881
      %v922 = vpack.c.bf16 %v834, %v833
      %v923 = vpack.c.bf16 %v842, %v841
      %v924 = vpack.c.bf16 %v890, %v889
      %v925 = vpack.c.bf16 %v850, %v849
      %v926 = vpack.c.bf16 %v858, %v857
      %927 = vst [vmem:[#allocation2] sm:$0xff] %v891
      %928 = vst [vmem:[#allocation2 + $0x8] sm:$0xff] %v892
      %929 = vst [vmem:[#allocation2 + $0x10] sm:$0xff] %v893
      %930 = vst [vmem:[#allocation2 + $0x18] sm:$0xff] %v894
      %931 = vst [vmem:[#allocation2 + $0x20] sm:$0xff] %v895
      %932 = vst [vmem:[#allocation2 + $0x28] sm:$0xff] %v896
      %933 = vst [vmem:[#allocation2 + $0x30] sm:$0xff] %v897
      %934 = vst [vmem:[#allocation2 + $0x38] sm:$0xff] %v898
      %935 = vst [vmem:[#allocation2 + $0x40] sm:$0xff] %v899
      %936 = vst [vmem:[#allocation2 + $0x48] sm:$0xff] %v900
      %937 = vst [vmem:[#allocation2 + $0x50] sm:$0xff] %v901
      %938 = vst [vmem:[#allocation2 + $0x58] sm:$0xff] %v902
      %939 = vst [vmem:[#allocation2 + $0x60] sm:$0xff] %v903
      %940 = vst [vmem:[#allocation2 + $0x68] sm:$0xff] %v904
      %941 = vst [vmem:[#allocation2 + $0x70] sm:$0xff] %v905
      %942 = vst [vmem:[#allocation2 + $0x78] sm:$0xff] %v906
      %943 = vst [vmem:[#allocation2 + $0x80] sm:$0xff] %v907
      %944 = vst [vmem:[#allocation2 + $0x88] sm:$0xff] %v908
      %945 = vst [vmem:[#allocation2 + $0x90] sm:$0xff] %v909
      %946 = vst [vmem:[#allocation2 + $0x98] sm:$0xff] %v910
      %947 = vst [vmem:[#allocation2 + $0xa0] sm:$0xff] %v911
      %948 = vst [vmem:[#allocation2 + $0xa8] sm:$0xff] %v912
      %949 = vst [vmem:[#allocation2 + $0xb0] sm:$0xff] %v913
      %950 = vst [vmem:[#allocation2 + $0xb8] sm:$0xff] %v914
      %951 = vst [vmem:[#allocation2 + $0xc0] sm:$0xff] %v915
      %952 = vst [vmem:[#allocation2 + $0xc8] sm:$0xff] %v916
      %953 = vst [vmem:[#allocation2 + $0xd0] sm:$0xff] %v917
      %954 = vst [vmem:[#allocation2 + $0xd8] sm:$0xff] %v918
      %955 = vst [vmem:[#allocation2 + $0xe0] sm:$0xff] %v919
      %956 = vst [vmem:[#allocation2 + $0xe8] sm:$0xff] %v920
      %957 = vst [vmem:[#allocation2 + $0xf0] sm:$0xff] %v921
      %958 = vst [vmem:[#allocation2 + $0xf8] sm:$0xff] %v922
      %959 = vst [vmem:[#allocation2 + $0x100] sm:$0xff] %v923
      %960 = vst [vmem:[#allocation2 + $0x108] sm:$0xff] %v924
      %961 = vst [vmem:[#allocation2 + $0x110] sm:$0xff] %v925
      %962 = vst [vmem:[#allocation2 + $0x118] sm:$0xff] %v926
      %v963 = vld [vmem:[#allocation2] sm:$0xff]
      %v964 = vld [vmem:[#allocation2 + $0x8] sm:$0xff]
      %v965 = vld [vmem:[#allocation2 + $0x10] sm:$0xff]
      %v966 = vld [vmem:[#allocation2 + $0x18] sm:$0xff]
      %v967 = vld [vmem:[#allocation2 + $0x20] sm:$0xff]
      %v968 = vld [vmem:[#allocation2 + $0x28] sm:$0xff]
      %v969 = vld [vmem:[#allocation2 + $0x30] sm:$0xff]
      %v970 = vld [vmem:[#allocation2 + $0x38] sm:$0xff]
      %v971 = vld [vmem:[#allocation2 + $0x40] sm:$0xff]
      %v972 = vld [vmem:[#allocation2 + $0x48] sm:$0xff]
      %v973 = vld [vmem:[#allocation2 + $0x50] sm:$0xff]
      %v974 = vld [vmem:[#allocation2 + $0x58] sm:$0xff]
      %v975 = vld [vmem:[#allocation2 + $0x60] sm:$0xff]
      %v976 = vld [vmem:[#allocation2 + $0x68] sm:$0xff]
      %v977 = vld [vmem:[#allocation2 + $0x70] sm:$0xff]
      %v978 = vld [vmem:[#allocation2 + $0x78] sm:$0xff]
      %v979 = vld [vmem:[#allocation2 + $0x80] sm:$0xff]
      %v980 = vld [vmem:[#allocation2 + $0x88] sm:$0xff]
      %v981 = vld [vmem:[#allocation2 + $0x90] sm:$0xff]
      %v982 = vld [vmem:[#allocation2 + $0x98] sm:$0xff]
      %v983 = vld [vmem:[#allocation2 + $0xa0] sm:$0xff]
      %v984 = vld [vmem:[#allocation2 + $0xa8] sm:$0xff]
      %v985 = vld [vmem:[#allocation2 + $0xb0] sm:$0xff]
      %v986 = vld [vmem:[#allocation2 + $0xb8] sm:$0xff]
      %v987 = vld [vmem:[#allocation2 + $0xc0] sm:$0xff]
      %v988 = vld [vmem:[#allocation2 + $0xc8] sm:$0xff]
      %v989 = vld [vmem:[#allocation2 + $0xd0] sm:$0xff]
      %v990 = vld [vmem:[#allocation2 + $0xd8] sm:$0xff]
      %v991 = vld [vmem:[#allocation2 + $0xe0] sm:$0xff]
      %v992 = vld [vmem:[#allocation2 + $0xe8] sm:$0xff]
      %v993 = vld [vmem:[#allocation2 + $0xf0] sm:$0xff]
      %v994 = vld [vmem:[#allocation2 + $0xf8] sm:$0xff]
      %v995 = vld [vmem:[#allocation2 + $0x100] sm:$0xff]
      %v996 = vld [vmem:[#allocation2 + $0x108] sm:$0xff]
      %v997 = vld [vmem:[#allocation2 + $0x110] sm:$0xff]
      %v998 = vld [vmem:[#allocation2 + $0x118] sm:$0xff]
      %v999 = vld [vmem:[%s3] sm:$0xf]
      %v1000 = vld [vmem:[%s3 + $0x4] sm:$0xf]
      %v1001 = vld [vmem:[%s3 + $0x8] sm:$0xf]
      %v1002 = vld [vmem:[%s3 + $0xc] sm:$0xf]
      %v1003 = vld [vmem:[%s3 + $0x10] sm:$0xf]
      %v1004 = vld [vmem:[%s3 + $0x14] sm:$0xf]
      %v1005 = vld [vmem:[%s3 + $0x18] sm:$0xf]
      %v1006 = vld [vmem:[%s3 + $0x1c] sm:$0xf]
      %v1007 = vld [vmem:[%s3 + $0x20] sm:$0xf]
      %v1008 = vld [vmem:[%s3 + $0x24] sm:$0xf]
      %v1009 = vld [vmem:[%s3 + $0x28] sm:$0xf]
      %v1010 = vld [vmem:[%s3 + $0x2c] sm:$0xf]
      %v1011 = vld [vmem:[%s3 + $0x30] sm:$0xf]
      %v1012 = vld [vmem:[%s3 + $0x34] sm:$0xf]
      %v1013 = vld [vmem:[%s3 + $0x38] sm:$0xf]
      %v1014 = vld [vmem:[%s3 + $0x3c] sm:$0xf]
      %v1015 = vld [vmem:[%s3 + $0x40] sm:$0xf]
      %v1016 = vld [vmem:[%s3 + $0x44] sm:$0xf]
      %v1017 = vld [vmem:[%s3 + $0x48] sm:$0xf]
      %v1018 = vld [vmem:[%s3 + $0x4c] sm:$0xf]
      %v1019 = vld [vmem:[%s3 + $0x50] sm:$0xf]
      %v1020 = vld [vmem:[%s3 + $0x54] sm:$0xf]
      %v1021 = vld [vmem:[%s3 + $0x58] sm:$0xf]
      %v1022 = vld [vmem:[%s3 + $0x5c] sm:$0xf]
      %v1023 = vld [vmem:[%s3 + $0x60] sm:$0xf]
      %v1024 = vld [vmem:[%s3 + $0x64] sm:$0xf]
      %v1025 = vld [vmem:[%s3 + $0x68] sm:$0xf]
      %v1026 = vld [vmem:[%s3 + $0x6c] sm:$0xf]
      %v1027 = vld [vmem:[%s3 + $0x70] sm:$0xf]
      %v1028 = vld [vmem:[%s3 + $0x74] sm:$0xf]
      %v1029 = vld [vmem:[%s3 + $0x78] sm:$0xf]
      %v1030 = vld [vmem:[%s3 + $0x7c] sm:$0xf]
      %v1031 = vld [vmem:[%s3 + $0x80] sm:$0xf]
      %v1032 = vld [vmem:[%s3 + $0x84] sm:$0xf]
      %v1033 = vld [vmem:[%s3 + $0x88] sm:$0xf]
      %v1034 = vld [vmem:[%s3 + $0x8c] sm:$0xf]
      %v1035 = vld [vmem:[%s3 + $0x90] sm:$0xf]
      %v1036 = vld [vmem:[%s3 + $0x94] sm:$0xf]
      %v1037 = vld [vmem:[%s3 + $0x98] sm:$0xf]
      %v1038 = vld [vmem:[%s3 + $0x9c] sm:$0xf]
      %v1039 = vld [vmem:[%s3 + $0xa0] sm:$0xf]
      %v1040 = vld [vmem:[%s3 + $0xa4] sm:$0xf]
      %v1041 = vld [vmem:[%s3 + $0xa8] sm:$0xf]
      %v1042 = vld [vmem:[%s3 + $0xac] sm:$0xf]
      %v1043 = vld [vmem:[%s3 + $0xb0] sm:$0xf]
      %v1044 = vld [vmem:[%s3 + $0xb4] sm:$0xf]
      %v1045 = vld [vmem:[%s3 + $0xb8] sm:$0xf]
      %v1046 = vld [vmem:[%s3 + $0xbc] sm:$0xf]
      %v1047 = vld [vmem:[%s3 + $0xc0] sm:$0xf]
      %v1048 = vld [vmem:[%s3 + $0xc4] sm:$0xf]
      %v1049 = vld [vmem:[%s3 + $0xc8] sm:$0xf]
      %v1050 = vld [vmem:[%s3 + $0xcc] sm:$0xf]
      %v1051 = vld [vmem:[%s3 + $0xd0] sm:$0xf]
      %v1052 = vld [vmem:[%s3 + $0xd4] sm:$0xf]
      %v1053 = vld [vmem:[%s3 + $0xd8] sm:$0xf]
      %v1054 = vld [vmem:[%s3 + $0xdc] sm:$0xf]
      %v1055 = vld [vmem:[%s3 + $0xe0] sm:$0xf]
      %v1056 = vld [vmem:[%s3 + $0xe4] sm:$0xf]
      %v1057 = vld [vmem:[%s3 + $0xe8] sm:$0xf]
      %v1058 = vld [vmem:[%s3 + $0xec] sm:$0xf]
      %v1059 = vld [vmem:[%s3 + $0xf0] sm:$0xf]
      %v1060 = vld [vmem:[%s3 + $0xf4] sm:$0xf]
      %v1061 = vld [vmem:[%s3 + $0xf8] sm:$0xf]
      %v1062 = vld [vmem:[%s3 + $0xfc] sm:$0xf]
      %v1063 = vld [vmem:[%s3 + $0x100] sm:$0xf]
      %v1064 = vld [vmem:[%s3 + $0x104] sm:$0xf]
      %v1065 = vld [vmem:[%s3 + $0x108] sm:$0xf]
      %v1066 = vld [vmem:[%s3 + $0x10c] sm:$0xf]
      %v1067 = vld [vmem:[%s3 + $0x110] sm:$0xf]
      %v1068 = vld [vmem:[%s3 + $0x114] sm:$0xf]
      %v1069 = vld [vmem:[%s3 + $0x118] sm:$0xf]
      %v1070 = vld [vmem:[%s3 + $0x11c] sm:$0xf]
      %v1071 = vld [vmem:[%s3 + $0x120] sm:$0xf]
      %v1072 = vld [vmem:[%s3 + $0x124] sm:$0xf]
      %v1073 = vld [vmem:[%s3 + $0x128] sm:$0xf]
      %v1074 = vld [vmem:[%s3 + $0x12c] sm:$0xf]
      %v1075 = vld [vmem:[%s3 + $0x130] sm:$0xf]
      %v1076 = vld [vmem:[%s3 + $0x134] sm:$0xf]
      %v1077 = vld [vmem:[%s3 + $0x138] sm:$0xf]
      %v1078 = vld [vmem:[%s3 + $0x13c] sm:$0xf]
      %v1079 = vld [vmem:[%s3 + $0x140] sm:$0xf]
      %v1080 = vld [vmem:[%s3 + $0x144] sm:$0xf]
      %v1081 = vld [vmem:[%s3 + $0x148] sm:$0xf]
      %v1082 = vld [vmem:[%s3 + $0x14c] sm:$0xf]
      %v1083 = vld [vmem:[%s3 + $0x150] sm:$0xf]
      %v1084 = vld [vmem:[%s3 + $0x154] sm:$0xf]
      %v1085 = vld [vmem:[%s3 + $0x158] sm:$0xf]
      %v1086 = vld [vmem:[%s3 + $0x15c] sm:$0xf]
      %v1087 = vld [vmem:[%s3 + $0x160] sm:$0xf]
      %v1088 = vld [vmem:[%s3 + $0x164] sm:$0xf]
      %v1089 = vld [vmem:[%s3 + $0x168] sm:$0xf]
      %v1090 = vld [vmem:[%s3 + $0x16c] sm:$0xf]
      %v1091 = vld [vmem:[%s3 + $0x170] sm:$0xf]
      %v1092 = vld [vmem:[%s3 + $0x174] sm:$0xf]
      %v1093 = vld [vmem:[%s3 + $0x178] sm:$0xf]
      %v1094 = vld [vmem:[%s3 + $0x17c] sm:$0xf]
      %v1095 = vld [vmem:[%s3 + $0x180] sm:$0xf]
      %v1096 = vld [vmem:[%s3 + $0x184] sm:$0xf]
      %v1097 = vld [vmem:[%s3 + $0x188] sm:$0xf]
      %v1098 = vld [vmem:[%s3 + $0x18c] sm:$0xf]
      %v1099 = vld [vmem:[%s3 + $0x190] sm:$0xf]
      %v1100 = vld [vmem:[%s3 + $0x194] sm:$0xf]
      %v1101 = vld [vmem:[%s3 + $0x198] sm:$0xf]
      %v1102 = vld [vmem:[%s3 + $0x19c] sm:$0xf]
      %v1103 = vld [vmem:[%s3 + $0x1a0] sm:$0xf]
      %v1104 = vld [vmem:[%s3 + $0x1a4] sm:$0xf]
      %v1105 = vld [vmem:[%s3 + $0x1a8] sm:$0xf]
      %v1106 = vld [vmem:[%s3 + $0x1ac] sm:$0xf]
      %v1107 = vld [vmem:[%s3 + $0x1b0] sm:$0xf]
      %v1108 = vld [vmem:[%s3 + $0x1b4] sm:$0xf]
      %v1109 = vld [vmem:[%s3 + $0x1b8] sm:$0xf]
      %v1110 = vld [vmem:[%s3 + $0x1bc] sm:$0xf]
      %v1111 = vld [vmem:[%s3 + $0x1c0] sm:$0xf]
      %v1112 = vld [vmem:[%s3 + $0x1c4] sm:$0xf]
      %v1113 = vld [vmem:[%s3 + $0x1c8] sm:$0xf]
      %v1114 = vld [vmem:[%s3 + $0x1cc] sm:$0xf]
      %v1115 = vld [vmem:[%s3 + $0x1d0] sm:$0xf]
      %v1116 = vld [vmem:[%s3 + $0x1d4] sm:$0xf]
      %v1117 = vld [vmem:[%s3 + $0x1d8] sm:$0xf]
      %v1118 = vld [vmem:[%s3 + $0x1dc] sm:$0xf]
      %v1119 = vld [vmem:[%s3 + $0x1e0] sm:$0xf]
      %v1120 = vld [vmem:[%s3 + $0x1e4] sm:$0xf]
      %v1121 = vld [vmem:[%s3 + $0x1e8] sm:$0xf]
      %v1122 = vld [vmem:[%s3 + $0x1ec] sm:$0xf]
      %v1123 = vld [vmem:[%s3 + $0x1f0] sm:$0xf]
      %v1124 = vld [vmem:[%s3 + $0x1f4] sm:$0xf]
      %v1125 = vld [vmem:[%s3 + $0x1f8] sm:$0xf]
      %v1126 = vld [vmem:[%s3 + $0x1fc] sm:$0xf]
      %v1127 = vld [vmem:[%s3 + $0x200] sm:$0xf]
      %v1128 = vld [vmem:[%s3 + $0x204] sm:$0xf]
      %v1129 = vld [vmem:[%s3 + $0x208] sm:$0xf]
      %v1130 = vld [vmem:[%s3 + $0x20c] sm:$0xf]
      %v1131 = vld [vmem:[%s3 + $0x210] sm:$0xf]
      %v1132 = vld [vmem:[%s3 + $0x214] sm:$0xf]
      %v1133 = vld [vmem:[%s3 + $0x218] sm:$0xf]
      %v1134 = vld [vmem:[%s3 + $0x21c] sm:$0xf]
      %v1135 = vld [vmem:[%s3 + $0x220] sm:$0xf]
      %v1136 = vld [vmem:[%s3 + $0x224] sm:$0xf]
      %v1137 = vld [vmem:[%s3 + $0x228] sm:$0xf]
      %v1138 = vld [vmem:[%s3 + $0x22c] sm:$0xf]
      %v1139 = vld [vmem:[%s3 + $0x230] sm:$0xf]
      %v1140 = vld [vmem:[%s3 + $0x234] sm:$0xf]
      %v1141 = vld [vmem:[%s3 + $0x238] sm:$0xf]
      %v1142 = vld [vmem:[%s3 + $0x23c] sm:$0xf]
      %v1143 = vld [vmem:[%s3 + $0x240] sm:$0xf]
      %v1144 = vld [vmem:[%s3 + $0x244] sm:$0xf]
      %v1145 = vld [vmem:[%s3 + $0x248] sm:$0xf]
      %v1146 = vld [vmem:[%s3 + $0x24c] sm:$0xf]
      %v1147 = vld [vmem:[%s3 + $0x250] sm:$0xf]
      %v1148 = vld [vmem:[%s3 + $0x254] sm:$0xf]
      %v1149 = vld [vmem:[%s3 + $0x258] sm:$0xf]
      %v1150 = vld [vmem:[%s3 + $0x25c] sm:$0xf]
      %v1151 = vld [vmem:[%s3 + $0x260] sm:$0xf]
      %v1152 = vld [vmem:[%s3 + $0x264] sm:$0xf]
      %v1153 = vld [vmem:[%s3 + $0x268] sm:$0xf]
      %v1154 = vld [vmem:[%s3 + $0x26c] sm:$0xf]
      %v1155 = vld [vmem:[%s3 + $0x270] sm:$0xf]
      %v1156 = vld [vmem:[%s3 + $0x274] sm:$0xf]
      %v1157 = vld [vmem:[%s3 + $0x278] sm:$0xf]
      %v1158 = vld [vmem:[%s3 + $0x27c] sm:$0xf]
      %v1159 = vld [vmem:[%s3 + $0x280] sm:$0xf]
      %v1160 = vld [vmem:[%s3 + $0x284] sm:$0xf]
      %v1161 = vld [vmem:[%s3 + $0x288] sm:$0xf]
      %v1162 = vld [vmem:[%s3 + $0x28c] sm:$0xf]
      %v1163 = vld [vmem:[%s3 + $0x290] sm:$0xf]
      %v1164 = vld [vmem:[%s3 + $0x294] sm:$0xf]
      %v1165 = vld [vmem:[%s3 + $0x298] sm:$0xf]
      %v1166 = vld [vmem:[%s3 + $0x29c] sm:$0xf]
      %v1167 = vld [vmem:[%s3 + $0x2a0] sm:$0xf]
      %v1168 = vld [vmem:[%s3 + $0x2a4] sm:$0xf]
      %v1169 = vld [vmem:[%s3 + $0x2a8] sm:$0xf]
      %v1170 = vld [vmem:[%s3 + $0x2ac] sm:$0xf]
      %v1171 = vld [vmem:[%s3 + $0x2b0] sm:$0xf]
      %v1172 = vld [vmem:[%s3 + $0x2b4] sm:$0xf]
      %v1173 = vld [vmem:[%s3 + $0x2b8] sm:$0xf]
      %v1174 = vld [vmem:[%s3 + $0x2bc] sm:$0xf]
      %v1175 = vld [vmem:[%s3 + $0x2c0] sm:$0xf]
      %v1176 = vld [vmem:[%s3 + $0x2c4] sm:$0xf]
      %v1177 = vld [vmem:[%s3 + $0x2c8] sm:$0xf]
      %v1178 = vld [vmem:[%s3 + $0x2cc] sm:$0xf]
      %v1179 = vld [vmem:[%s3 + $0x2d0] sm:$0xf]
      %v1180 = vld [vmem:[%s3 + $0x2d4] sm:$0xf]
      %v1181 = vld [vmem:[%s3 + $0x2d8] sm:$0xf]
      %v1182 = vld [vmem:[%s3 + $0x2dc] sm:$0xf]
      %v1183 = vld [vmem:[%s3 + $0x2e0] sm:$0xf]
      %v1184 = vld [vmem:[%s3 + $0x2e4] sm:$0xf]
      %v1185 = vld [vmem:[%s3 + $0x2e8] sm:$0xf]
      %v1186 = vld [vmem:[%s3 + $0x2ec] sm:$0xf]
      %v1187 = vld [vmem:[%s3 + $0x2f0] sm:$0xf]
      %v1188 = vld [vmem:[%s3 + $0x2f4] sm:$0xf]
      %v1189 = vld [vmem:[%s3 + $0x2f8] sm:$0xf]
      %v1190 = vld [vmem:[%s3 + $0x2fc] sm:$0xf]
      %v1191 = vld [vmem:[%s3 + $0x300] sm:$0xf]
      %v1192 = vld [vmem:[%s3 + $0x304] sm:$0xf]
      %v1193 = vld [vmem:[%s3 + $0x308] sm:$0xf]
      %v1194 = vld [vmem:[%s3 + $0x30c] sm:$0xf]
      %v1195 = vld [vmem:[%s3 + $0x310] sm:$0xf]
      %v1196 = vld [vmem:[%s3 + $0x314] sm:$0xf]
      %v1197 = vld [vmem:[%s3 + $0x318] sm:$0xf]
      %v1198 = vld [vmem:[%s3 + $0x31c] sm:$0xf]
      %v1199 = vld [vmem:[%s3 + $0x320] sm:$0xf]
      %v1200 = vld [vmem:[%s3 + $0x324] sm:$0xf]
      %v1201 = vld [vmem:[%s3 + $0x328] sm:$0xf]
      %v1202 = vld [vmem:[%s3 + $0x32c] sm:$0xf]
      %v1203 = vld [vmem:[%s3 + $0x330] sm:$0xf]
      %v1204 = vld [vmem:[%s3 + $0x334] sm:$0xf]
      %v1205 = vld [vmem:[%s3 + $0x338] sm:$0xf]
      %v1206 = vld [vmem:[%s3 + $0x33c] sm:$0xf]
      %v1207 = vld [vmem:[%s3 + $0x340] sm:$0xf]
      %v1208 = vld [vmem:[%s3 + $0x344] sm:$0xf]
      %v1209 = vld [vmem:[%s3 + $0x348] sm:$0xf]
      %v1210 = vld [vmem:[%s3 + $0x34c] sm:$0xf]
      %v1211 = vld [vmem:[%s3 + $0x350] sm:$0xf]
      %v1212 = vld [vmem:[%s3 + $0x354] sm:$0xf]
      %v1213 = vld [vmem:[%s3 + $0x358] sm:$0xf]
      %v1214 = vld [vmem:[%s3 + $0x35c] sm:$0xf]
      %v1215 = vld [vmem:[%s3 + $0x360] sm:$0xf]
      %v1216 = vld [vmem:[%s3 + $0x364] sm:$0xf]
      %v1217 = vld [vmem:[%s3 + $0x368] sm:$0xf]
      %v1218 = vld [vmem:[%s3 + $0x36c] sm:$0xf]
      %v1219 = vld [vmem:[%s3 + $0x370] sm:$0xf]
      %v1220 = vld [vmem:[%s3 + $0x374] sm:$0xf]
      %v1221 = vld [vmem:[%s3 + $0x378] sm:$0xf]
      %v1222 = vld [vmem:[%s3 + $0x37c] sm:$0xf]
      %v1223 = vld [vmem:[%s3 + $0x380] sm:$0xf]
      %v1224 = vld [vmem:[%s3 + $0x384] sm:$0xf]
      %v1225 = vld [vmem:[%s3 + $0x388] sm:$0xf]
      %v1226 = vld [vmem:[%s3 + $0x38c] sm:$0xf]
      %v1227 = vld [vmem:[%s3 + $0x390] sm:$0xf]
      %v1228 = vld [vmem:[%s3 + $0x394] sm:$0xf]
      %v1229 = vld [vmem:[%s3 + $0x398] sm:$0xf]
      %v1230 = vld [vmem:[%s3 + $0x39c] sm:$0xf]
      %v1231 = vld [vmem:[%s3 + $0x3a0] sm:$0xf]
      %v1232 = vld [vmem:[%s3 + $0x3a4] sm:$0xf]
      %v1233 = vld [vmem:[%s3 + $0x3a8] sm:$0xf]
      %v1234 = vld [vmem:[%s3 + $0x3ac] sm:$0xf]
      %v1235 = vld [vmem:[%s3 + $0x3b0] sm:$0xf]
      %v1236 = vld [vmem:[%s3 + $0x3b4] sm:$0xf]
      %v1237 = vld [vmem:[%s3 + $0x3b8] sm:$0xf]
      %v1238 = vld [vmem:[%s3 + $0x3bc] sm:$0xf]
      %v1239 = vld [vmem:[%s3 + $0x3c0] sm:$0xf]
      %v1240 = vld [vmem:[%s3 + $0x3c4] sm:$0xf]
      %v1241 = vld [vmem:[%s3 + $0x3c8] sm:$0xf]
      %v1242 = vld [vmem:[%s3 + $0x3cc] sm:$0xf]
      %v1243 = vld [vmem:[%s3 + $0x3d0] sm:$0xf]
      %v1244 = vld [vmem:[%s3 + $0x3d4] sm:$0xf]
      %v1245 = vld [vmem:[%s3 + $0x3d8] sm:$0xf]
      %v1246 = vld [vmem:[%s3 + $0x3dc] sm:$0xf]
      %v1247 = vld [vmem:[%s3 + $0x3e0] sm:$0xf]
      %v1248 = vld [vmem:[%s3 + $0x3e4] sm:$0xf]
      %v1249 = vld [vmem:[%s3 + $0x3e8] sm:$0xf]
      %v1250 = vld [vmem:[%s3 + $0x3ec] sm:$0xf]
      %v1251 = vld [vmem:[%s3 + $0x3f0] sm:$0xf]
      %v1252 = vld [vmem:[%s3 + $0x3f4] sm:$0xf]
      %v1253 = vld [vmem:[%s3 + $0x3f8] sm:$0xf]
      %v1254 = vld [vmem:[%s3 + $0x3fc] sm:$0xf]
      %v1255 = vld [vmem:[%s3 + $0x400] sm:$0xf]
      %v1256 = vld [vmem:[%s3 + $0x404] sm:$0xf]
      %v1257 = vld [vmem:[%s3 + $0x408] sm:$0xf]
      %v1258 = vld [vmem:[%s3 + $0x40c] sm:$0xf]
      %v1259 = vld [vmem:[%s3 + $0x410] sm:$0xf]
      %v1260 = vld [vmem:[%s3 + $0x414] sm:$0xf]
      %v1261 = vld [vmem:[%s3 + $0x418] sm:$0xf]
      %v1262 = vld [vmem:[%s3 + $0x41c] sm:$0xf]
      %v1263 = vld [vmem:[%s3 + $0x420] sm:$0xf]
      %v1264 = vld [vmem:[%s3 + $0x424] sm:$0xf]
      %v1265 = vld [vmem:[%s3 + $0x428] sm:$0xf]
      %v1266 = vld [vmem:[%s3 + $0x42c] sm:$0xf]
      %v1267 = vld [vmem:[%s3 + $0x430] sm:$0xf]
      %v1268 = vld [vmem:[%s3 + $0x434] sm:$0xf]
      %v1269 = vld [vmem:[%s3 + $0x438] sm:$0xf]
      %v1270 = vld [vmem:[%s3 + $0x43c] sm:$0xf]
      %v1271 = vld [vmem:[%s3 + $0x440] sm:$0xf]
      %v1272 = vld [vmem:[%s3 + $0x444] sm:$0xf]
      %v1273 = vld [vmem:[%s3 + $0x448] sm:$0xf]
      %v1274 = vld [vmem:[%s3 + $0x44c] sm:$0xf]
      %v1275 = vld [vmem:[%s3 + $0x450] sm:$0xf]
      %v1276 = vld [vmem:[%s3 + $0x454] sm:$0xf]
      %v1277 = vld [vmem:[%s3 + $0x458] sm:$0xf]
      %v1278 = vld [vmem:[%s3 + $0x45c] sm:$0xf]
      %v1279 = vld [vmem:[%s3 + $0x460] sm:$0xf]
      %v1280 = vld [vmem:[%s3 + $0x464] sm:$0xf]
      %v1281 = vld [vmem:[%s3 + $0x468] sm:$0xf]
      %v1282 = vld [vmem:[%s3 + $0x46c] sm:$0xf]
      %v1283 = vld [vmem:[%s3 + $0x470] sm:$0xf]
      %v1284 = vld [vmem:[%s3 + $0x474] sm:$0xf]
      %v1285 = vld [vmem:[%s3 + $0x478] sm:$0xf]
      %v1286 = vld [vmem:[%s3 + $0x47c] sm:$0xf]
      %v1287 = vld [vmem:[%s4] sm:$0x1]
      %v1289 = vlaneseq
      %v1290 = vshrl.u32 %v1289, 7
      %v1291 = vsub.s32 0, %v1290
      %v1292 = vrot.slane %v1287, %v1291
      %v1582 = vunpack.c.l.b16 %v999
      %v1583 = vunpack.c.l.b16 %v1000
      %v1584 = vunpack.c.l.b16 %v1001
      %v1585 = vunpack.c.l.b16 %v1002
      %v1586 = vunpack.c.l.b16 %v1003
      %v1587 = vunpack.c.l.b16 %v1004
      %v1588 = vunpack.c.l.b16 %v1005
      %v1589 = vunpack.c.l.b16 %v1006
      %v1590 = vunpack.c.l.b16 %v1007
      %v1591 = vunpack.c.l.b16 %v1008
      %v1592 = vunpack.c.l.b16 %v1009
      %v1593 = vunpack.c.l.b16 %v1010
      %v1594 = vunpack.c.l.b16 %v1011
      %v1595 = vunpack.c.l.b16 %v1012
      %v1596 = vunpack.c.l.b16 %v1013
      %v1597 = vunpack.c.l.b16 %v1014
      %v1598 = vunpack.c.l.b16 %v1015
      %v1599 = vunpack.c.l.b16 %v1016
      %v1600 = vunpack.c.l.b16 %v1017
      %v1601 = vunpack.c.l.b16 %v1018
      %v1602 = vunpack.c.l.b16 %v1019
      %v1603 = vunpack.c.l.b16 %v1020
      %v1604 = vunpack.c.l.b16 %v1021
      %v1605 = vunpack.c.l.b16 %v1022
      %v1606 = vunpack.c.l.b16 %v1023
      %v1607 = vunpack.c.l.b16 %v1024
      %v1608 = vunpack.c.l.b16 %v1025
      %v1609 = vunpack.c.l.b16 %v1026
      %v1610 = vunpack.c.l.b16 %v1027
      %v1611 = vunpack.c.l.b16 %v1028
      %v1612 = vunpack.c.l.b16 %v1029
      %v1613 = vunpack.c.l.b16 %v1030
      %v1614 = vunpack.c.l.b16 %v1031
      %v1615 = vunpack.c.l.b16 %v1032
      %v1616 = vunpack.c.l.b16 %v1033
      %v1617 = vunpack.c.l.b16 %v1034
      %v1618 = vunpack.c.l.b16 %v1035
      %v1619 = vunpack.c.l.b16 %v1036
      %v1620 = vunpack.c.l.b16 %v1037
      %v1621 = vunpack.c.l.b16 %v1038
      %v1622 = vunpack.c.l.b16 %v1039
      %v1623 = vunpack.c.l.b16 %v1040
      %v1624 = vunpack.c.l.b16 %v1041
      %v1625 = vunpack.c.l.b16 %v1042
      %v1626 = vunpack.c.l.b16 %v1043
      %v1627 = vunpack.c.l.b16 %v1044
      %v1628 = vunpack.c.l.b16 %v1045
      %v1629 = vunpack.c.l.b16 %v1046
      %v1630 = vunpack.c.l.b16 %v1047
      %v1631 = vunpack.c.l.b16 %v1048
      %v1632 = vunpack.c.l.b16 %v1049
      %v1633 = vunpack.c.l.b16 %v1050
      %v1634 = vunpack.c.l.b16 %v1051
      %v1635 = vunpack.c.l.b16 %v1052
      %v1636 = vunpack.c.l.b16 %v1053
      %v1637 = vunpack.c.l.b16 %v1054
      %v1638 = vunpack.c.l.b16 %v1055
      %v1639 = vunpack.c.l.b16 %v1056
      %v1640 = vunpack.c.l.b16 %v1057
      %v1641 = vunpack.c.l.b16 %v1058
      %v1642 = vunpack.c.l.b16 %v1059
      %v1643 = vunpack.c.l.b16 %v1060
      %v1644 = vunpack.c.l.b16 %v1061
      %v1645 = vunpack.c.l.b16 %v1062
      %v1646 = vunpack.c.l.b16 %v1063
      %v1647 = vunpack.c.l.b16 %v1064
      %v1648 = vunpack.c.l.b16 %v1065
      %v1649 = vunpack.c.l.b16 %v1066
      %v1650 = vunpack.c.l.b16 %v1067
      %v1651 = vunpack.c.l.b16 %v1068
      %v1652 = vunpack.c.l.b16 %v1069
      %v1653 = vunpack.c.l.b16 %v1070
      %v1654 = vunpack.c.l.b16 %v1071
      %v1655 = vunpack.c.l.b16 %v1072
      %v1656 = vunpack.c.l.b16 %v1073
      %v1657 = vunpack.c.l.b16 %v1074
      %v1658 = vunpack.c.l.b16 %v1075
      %v1659 = vunpack.c.l.b16 %v1076
      %v1660 = vunpack.c.l.b16 %v1077
      %v1661 = vunpack.c.l.b16 %v1078
      %v1662 = vunpack.c.l.b16 %v1079
      %v1663 = vunpack.c.l.b16 %v1080
      %v1664 = vunpack.c.l.b16 %v1081
      %v1665 = vunpack.c.l.b16 %v1082
      %v1666 = vunpack.c.l.b16 %v1083
      %v1667 = vunpack.c.l.b16 %v1084
      %v1668 = vunpack.c.l.b16 %v1085
      %v1669 = vunpack.c.l.b16 %v1086
      %v1670 = vunpack.c.l.b16 %v1087
      %v1671 = vunpack.c.l.b16 %v1088
      %v1672 = vunpack.c.l.b16 %v1089
      %v1673 = vunpack.c.l.b16 %v1090
      %v1674 = vunpack.c.l.b16 %v1091
      %v1675 = vunpack.c.l.b16 %v1092
      %v1676 = vunpack.c.l.b16 %v1093
      %v1677 = vunpack.c.l.b16 %v1094
      %v1678 = vunpack.c.l.b16 %v1095
      %v1679 = vunpack.c.l.b16 %v1096
      %v1680 = vunpack.c.l.b16 %v1097
      %v1681 = vunpack.c.l.b16 %v1098
      %v1682 = vunpack.c.l.b16 %v1099
      %v1683 = vunpack.c.l.b16 %v1100
      %v1684 = vunpack.c.l.b16 %v1101
      %v1685 = vunpack.c.l.b16 %v1102
      %v1686 = vunpack.c.l.b16 %v1103
      %v1687 = vunpack.c.l.b16 %v1104
      %v1688 = vunpack.c.l.b16 %v1105
      %v1689 = vunpack.c.l.b16 %v1106
      %v1690 = vunpack.c.l.b16 %v1107
      %v1691 = vunpack.c.l.b16 %v1108
      %v1692 = vunpack.c.l.b16 %v1109
      %v1693 = vunpack.c.l.b16 %v1110
      %v1694 = vunpack.c.l.b16 %v1111
      %v1695 = vunpack.c.l.b16 %v1112
      %v1696 = vunpack.c.l.b16 %v1113
      %v1697 = vunpack.c.l.b16 %v1114
      %v1698 = vunpack.c.l.b16 %v1115
      %v1699 = vunpack.c.l.b16 %v1116
      %v1700 = vunpack.c.l.b16 %v1117
      %v1701 = vunpack.c.l.b16 %v1118
      %v1702 = vunpack.c.l.b16 %v1119
      %v1703 = vunpack.c.l.b16 %v1120
      %v1704 = vunpack.c.l.b16 %v1121
      %v1705 = vunpack.c.l.b16 %v1122
      %v1706 = vunpack.c.l.b16 %v1123
      %v1707 = vunpack.c.l.b16 %v1124
      %v1708 = vunpack.c.l.b16 %v1125
      %v1709 = vunpack.c.l.b16 %v1126
      %v1710 = vunpack.c.l.b16 %v1127
      %v1711 = vunpack.c.l.b16 %v1128
      %v1712 = vunpack.c.l.b16 %v1129
      %v1713 = vunpack.c.l.b16 %v1130
      %v1714 = vunpack.c.l.b16 %v1131
      %v1715 = vunpack.c.l.b16 %v1132
      %v1716 = vunpack.c.l.b16 %v1133
      %v1717 = vunpack.c.l.b16 %v1134
      %v1718 = vunpack.c.l.b16 %v1135
      %v1719 = vunpack.c.l.b16 %v1136
      %v1720 = vunpack.c.l.b16 %v1137
      %v1721 = vunpack.c.l.b16 %v1138
      %v1722 = vunpack.c.l.b16 %v1139
      %v1723 = vunpack.c.l.b16 %v1140
      %v1724 = vunpack.c.l.b16 %v1141
      %v1725 = vunpack.c.l.b16 %v1142
      %v1726 = vunpack.c.l.b16 %v1143
      %v1727 = vunpack.c.l.b16 %v1144
      %v1728 = vunpack.c.l.b16 %v1145
      %v1729 = vunpack.c.l.b16 %v1146
      %v1730 = vunpack.c.l.b16 %v1147
      %v1731 = vunpack.c.l.b16 %v1148
      %v1732 = vunpack.c.l.b16 %v1149
      %v1733 = vunpack.c.l.b16 %v1150
      %v1734 = vunpack.c.l.b16 %v1151
      %v1735 = vunpack.c.l.b16 %v1152
      %v1736 = vunpack.c.l.b16 %v1153
      %v1737 = vunpack.c.l.b16 %v1154
      %v1738 = vunpack.c.l.b16 %v1155
      %v1739 = vunpack.c.l.b16 %v1156
      %v1740 = vunpack.c.l.b16 %v1157
      %v1741 = vunpack.c.l.b16 %v1158
      %v1742 = vunpack.c.l.b16 %v1159
      %v1743 = vunpack.c.l.b16 %v1160
      %v1744 = vunpack.c.l.b16 %v1161
      %v1745 = vunpack.c.l.b16 %v1162
      %v1746 = vunpack.c.l.b16 %v1163
      %v1747 = vunpack.c.l.b16 %v1164
      %v1748 = vunpack.c.l.b16 %v1165
      %v1749 = vunpack.c.l.b16 %v1166
      %v1750 = vunpack.c.l.b16 %v1167
      %v1751 = vunpack.c.l.b16 %v1168
      %v1752 = vunpack.c.l.b16 %v1169
      %v1753 = vunpack.c.l.b16 %v1170
      %v1754 = vunpack.c.l.b16 %v1171
      %v1755 = vunpack.c.l.b16 %v1172
      %v1756 = vunpack.c.l.b16 %v1173
      %v1757 = vunpack.c.l.b16 %v1174
      %v1758 = vunpack.c.l.b16 %v1175
      %v1759 = vunpack.c.l.b16 %v1176
      %v1760 = vunpack.c.l.b16 %v1177
      %v1761 = vunpack.c.l.b16 %v1178
      %v1762 = vunpack.c.l.b16 %v1179
      %v1763 = vunpack.c.l.b16 %v1180
      %v1764 = vunpack.c.l.b16 %v1181
      %v1765 = vunpack.c.l.b16 %v1182
      %v1766 = vunpack.c.l.b16 %v1183
      %v1767 = vunpack.c.l.b16 %v1184
      %v1768 = vunpack.c.l.b16 %v1185
      %v1769 = vunpack.c.l.b16 %v1186
      %v1770 = vunpack.c.l.b16 %v1187
      %v1771 = vunpack.c.l.b16 %v1188
      %v1772 = vunpack.c.l.b16 %v1189
      %v1773 = vunpack.c.l.b16 %v1190
      %v1774 = vunpack.c.l.b16 %v1191
      %v1775 = vunpack.c.l.b16 %v1192
      %v1776 = vunpack.c.l.b16 %v1193
      %v1777 = vunpack.c.l.b16 %v1194
      %v1778 = vunpack.c.l.b16 %v1195
      %v1779 = vunpack.c.l.b16 %v1196
      %v1780 = vunpack.c.l.b16 %v1197
      %v1781 = vunpack.c.l.b16 %v1198
      %v1782 = vunpack.c.l.b16 %v1199
      %v1783 = vunpack.c.l.b16 %v1200
      %v1784 = vunpack.c.l.b16 %v1201
      %v1785 = vunpack.c.l.b16 %v1202
      %v1786 = vunpack.c.l.b16 %v1203
      %v1787 = vunpack.c.l.b16 %v1204
      %v1788 = vunpack.c.l.b16 %v1205
      %v1789 = vunpack.c.l.b16 %v1206
      %v1790 = vunpack.c.l.b16 %v1207
      %v1791 = vunpack.c.l.b16 %v1208
      %v1792 = vunpack.c.l.b16 %v1209
      %v1793 = vunpack.c.l.b16 %v1210
      %v1794 = vunpack.c.l.b16 %v1211
      %v1795 = vunpack.c.l.b16 %v1212
      %v1796 = vunpack.c.l.b16 %v1213
      %v1797 = vunpack.c.l.b16 %v1214
      %v1798 = vunpack.c.l.b16 %v1215
      %v1799 = vunpack.c.l.b16 %v1216
      %v1800 = vunpack.c.l.b16 %v1217
      %v1801 = vunpack.c.l.b16 %v1218
      %v1802 = vunpack.c.l.b16 %v1219
      %v1803 = vunpack.c.l.b16 %v1220
      %v1804 = vunpack.c.l.b16 %v1221
      %v1805 = vunpack.c.l.b16 %v1222
      %v1806 = vunpack.c.l.b16 %v1223
      %v1807 = vunpack.c.l.b16 %v1224
      %v1808 = vunpack.c.l.b16 %v1225
      %v1809 = vunpack.c.l.b16 %v1226
      %v1810 = vunpack.c.l.b16 %v1227
      %v1811 = vunpack.c.l.b16 %v1228
      %v1812 = vunpack.c.l.b16 %v1229
      %v1813 = vunpack.c.l.b16 %v1230
      %v1814 = vunpack.c.l.b16 %v1231
      %v1815 = vunpack.c.l.b16 %v1232
      %v1816 = vunpack.c.l.b16 %v1233
      %v1817 = vunpack.c.l.b16 %v1234
      %v1818 = vunpack.c.l.b16 %v1235
      %v1819 = vunpack.c.l.b16 %v1236
      %v1820 = vunpack.c.l.b16 %v1237
      %v1821 = vunpack.c.l.b16 %v1238
      %v1822 = vunpack.c.l.b16 %v1239
      %v1823 = vunpack.c.l.b16 %v1240
      %v1824 = vunpack.c.l.b16 %v1241
      %v1825 = vunpack.c.l.b16 %v1242
      %v1826 = vunpack.c.l.b16 %v1243
      %v1827 = vunpack.c.l.b16 %v1244
      %v1828 = vunpack.c.l.b16 %v1245
      %v1829 = vunpack.c.l.b16 %v1246
      %v1830 = vunpack.c.l.b16 %v1247
      %v1831 = vunpack.c.l.b16 %v1248
      %v1832 = vunpack.c.l.b16 %v1249
      %v1833 = vunpack.c.l.b16 %v1250
      %v1834 = vunpack.c.l.b16 %v1251
      %v1835 = vunpack.c.l.b16 %v1252
      %v1836 = vunpack.c.l.b16 %v1253
      %v1837 = vunpack.c.l.b16 %v1254
      %v1838 = vunpack.c.l.b16 %v1255
      %v1839 = vunpack.c.l.b16 %v1256
      %v1840 = vunpack.c.l.b16 %v1257
      %v1841 = vunpack.c.l.b16 %v1258
      %v1842 = vunpack.c.l.b16 %v1259
      %v1843 = vunpack.c.l.b16 %v1260
      %v1844 = vunpack.c.l.b16 %v1261
      %v1845 = vunpack.c.l.b16 %v1262
      %v1846 = vunpack.c.l.b16 %v1263
      %v1847 = vunpack.c.l.b16 %v1264
      %v1848 = vunpack.c.l.b16 %v1265
      %v1849 = vunpack.c.l.b16 %v1266
      %v1850 = vunpack.c.l.b16 %v1267
      %v1851 = vunpack.c.l.b16 %v1268
      %v1852 = vunpack.c.l.b16 %v1269
      %v1853 = vunpack.c.l.b16 %v1270
      %v1854 = vunpack.c.l.b16 %v1271
      %v1855 = vunpack.c.l.b16 %v1272
      %v1856 = vunpack.c.l.b16 %v1273
      %v1857 = vunpack.c.l.b16 %v1274
      %v1858 = vunpack.c.l.b16 %v1275
      %v1859 = vunpack.c.l.b16 %v1276
      %v1860 = vunpack.c.l.b16 %v1277
      %v1861 = vunpack.c.l.b16 %v1278
      %v1862 = vunpack.c.l.b16 %v1279
      %v1863 = vunpack.c.l.b16 %v1280
      %v1864 = vunpack.c.l.b16 %v1281
      %v1865 = vunpack.c.l.b16 %v1282
      %v1866 = vunpack.c.l.b16 %v1283
      %v1867 = vunpack.c.l.b16 %v1284
      %v1868 = vunpack.c.l.b16 %v1285
      %v1869 = vunpack.c.l.b16 %v1286
      %v1870 = vpack.c.b16 %v1583, %v1582
      %v1871 = vpack.c.b16 %v1585, %v1584
      %v1872 = vpack.c.b16 %v1587, %v1586
      %v1873 = vpack.c.b16 %v1589, %v1588
      %v1874 = vpack.c.b16 %v1591, %v1590
      %v1875 = vpack.c.b16 %v1593, %v1592
      %v1876 = vpack.c.b16 %v1595, %v1594
      %v1877 = vpack.c.b16 %v1597, %v1596
      %v1878 = vpack.c.b16 %v1599, %v1598
      %v1879 = vpack.c.b16 %v1601, %v1600
      %v1880 = vpack.c.b16 %v1603, %v1602
      %v1881 = vpack.c.b16 %v1605, %v1604
      %v1882 = vpack.c.b16 %v1607, %v1606
      %v1883 = vpack.c.b16 %v1609, %v1608
      %v1884 = vpack.c.b16 %v1611, %v1610
      %v1885 = vpack.c.b16 %v1613, %v1612
      %v1886 = vpack.c.b16 %v1615, %v1614
      %v1887 = vpack.c.b16 %v1617, %v1616
      %v1888 = vpack.c.b16 %v1619, %v1618
      %v1889 = vpack.c.b16 %v1621, %v1620
      %v1890 = vpack.c.b16 %v1623, %v1622
      %v1891 = vpack.c.b16 %v1625, %v1624
      %v1892 = vpack.c.b16 %v1627, %v1626
      %v1893 = vpack.c.b16 %v1629, %v1628
      %v1894 = vpack.c.b16 %v1631, %v1630
      %v1895 = vpack.c.b16 %v1633, %v1632
      %v1896 = vpack.c.b16 %v1635, %v1634
      %v1897 = vpack.c.b16 %v1637, %v1636
      %v1898 = vpack.c.b16 %v1639, %v1638
      %v1899 = vpack.c.b16 %v1641, %v1640
      %v1900 = vpack.c.b16 %v1643, %v1642
      %v1901 = vpack.c.b16 %v1645, %v1644
      %v1902 = vpack.c.b16 %v1647, %v1646
      %v1903 = vpack.c.b16 %v1649, %v1648
      %v1904 = vpack.c.b16 %v1651, %v1650
      %v1905 = vpack.c.b16 %v1653, %v1652
      %v1906 = vpack.c.b16 %v1655, %v1654
      %v1907 = vpack.c.b16 %v1657, %v1656
      %v1908 = vpack.c.b16 %v1659, %v1658
      %v1909 = vpack.c.b16 %v1661, %v1660
      %v1910 = vpack.c.b16 %v1663, %v1662
      %v1911 = vpack.c.b16 %v1665, %v1664
      %v1912 = vpack.c.b16 %v1667, %v1666
      %v1913 = vpack.c.b16 %v1669, %v1668
      %v1914 = vpack.c.b16 %v1671, %v1670
      %v1915 = vpack.c.b16 %v1673, %v1672
      %v1916 = vpack.c.b16 %v1675, %v1674
      %v1917 = vpack.c.b16 %v1677, %v1676
      %v1918 = vpack.c.b16 %v1679, %v1678
      %v1919 = vpack.c.b16 %v1681, %v1680
      %v1920 = vpack.c.b16 %v1683, %v1682
      %v1921 = vpack.c.b16 %v1685, %v1684
      %v1922 = vpack.c.b16 %v1687, %v1686
      %v1923 = vpack.c.b16 %v1689, %v1688
      %v1924 = vpack.c.b16 %v1691, %v1690
      %v1925 = vpack.c.b16 %v1693, %v1692
      %v1926 = vpack.c.b16 %v1695, %v1694
      %v1927 = vpack.c.b16 %v1697, %v1696
      %v1928 = vpack.c.b16 %v1699, %v1698
      %v1929 = vpack.c.b16 %v1701, %v1700
      %v1930 = vpack.c.b16 %v1703, %v1702
      %v1931 = vpack.c.b16 %v1705, %v1704
      %v1932 = vpack.c.b16 %v1707, %v1706
      %v1933 = vpack.c.b16 %v1709, %v1708
      %v1934 = vpack.c.b16 %v1711, %v1710
      %v1935 = vpack.c.b16 %v1713, %v1712
      %v1936 = vpack.c.b16 %v1715, %v1714
      %v1937 = vpack.c.b16 %v1717, %v1716
      %v1938 = vpack.c.b16 %v1719, %v1718
      %v1939 = vpack.c.b16 %v1721, %v1720
      %v1940 = vpack.c.b16 %v1723, %v1722
      %v1941 = vpack.c.b16 %v1725, %v1724
      %v1942 = vpack.c.b16 %v1727, %v1726
      %v1943 = vpack.c.b16 %v1729, %v1728
      %v1944 = vpack.c.b16 %v1731, %v1730
      %v1945 = vpack.c.b16 %v1733, %v1732
      %v1946 = vpack.c.b16 %v1735, %v1734
      %v1947 = vpack.c.b16 %v1737, %v1736
      %v1948 = vpack.c.b16 %v1739, %v1738
      %v1949 = vpack.c.b16 %v1741, %v1740
      %v1950 = vpack.c.b16 %v1743, %v1742
      %v1951 = vpack.c.b16 %v1745, %v1744
      %v1952 = vpack.c.b16 %v1747, %v1746
      %v1953 = vpack.c.b16 %v1749, %v1748
      %v1954 = vpack.c.b16 %v1751, %v1750
      %v1955 = vpack.c.b16 %v1753, %v1752
      %v1956 = vpack.c.b16 %v1755, %v1754
      %v1957 = vpack.c.b16 %v1757, %v1756
      %v1958 = vpack.c.b16 %v1759, %v1758
      %v1959 = vpack.c.b16 %v1761, %v1760
      %v1960 = vpack.c.b16 %v1763, %v1762
      %v1961 = vpack.c.b16 %v1765, %v1764
      %v1962 = vpack.c.b16 %v1767, %v1766
      %v1963 = vpack.c.b16 %v1769, %v1768
      %v1964 = vpack.c.b16 %v1771, %v1770
      %v1965 = vpack.c.b16 %v1773, %v1772
      %v1966 = vpack.c.b16 %v1775, %v1774
      %v1967 = vpack.c.b16 %v1777, %v1776
      %v1968 = vpack.c.b16 %v1779, %v1778
      %v1969 = vpack.c.b16 %v1781, %v1780
      %v1970 = vpack.c.b16 %v1783, %v1782
      %v1971 = vpack.c.b16 %v1785, %v1784
      %v1972 = vpack.c.b16 %v1787, %v1786
      %v1973 = vpack.c.b16 %v1789, %v1788
      %v1974 = vpack.c.b16 %v1791, %v1790
      %v1975 = vpack.c.b16 %v1793, %v1792
      %v1976 = vpack.c.b16 %v1795, %v1794
      %v1977 = vpack.c.b16 %v1797, %v1796
      %v1978 = vpack.c.b16 %v1799, %v1798
      %v1979 = vpack.c.b16 %v1801, %v1800
      %v1980 = vpack.c.b16 %v1803, %v1802
      %v1981 = vpack.c.b16 %v1805, %v1804
      %v1982 = vpack.c.b16 %v1807, %v1806
      %v1983 = vpack.c.b16 %v1809, %v1808
      %v1984 = vpack.c.b16 %v1811, %v1810
      %v1985 = vpack.c.b16 %v1813, %v1812
      %v1986 = vpack.c.b16 %v1815, %v1814
      %v1987 = vpack.c.b16 %v1817, %v1816
      %v1988 = vpack.c.b16 %v1819, %v1818
      %v1989 = vpack.c.b16 %v1821, %v1820
      %v1990 = vpack.c.b16 %v1823, %v1822
      %v1991 = vpack.c.b16 %v1825, %v1824
      %v1992 = vpack.c.b16 %v1827, %v1826
      %v1993 = vpack.c.b16 %v1829, %v1828
      %v1994 = vpack.c.b16 %v1831, %v1830
      %v1995 = vpack.c.b16 %v1833, %v1832
      %v1996 = vpack.c.b16 %v1835, %v1834
      %v1997 = vpack.c.b16 %v1837, %v1836
      %v1998 = vpack.c.b16 %v1839, %v1838
      %v1999 = vpack.c.b16 %v1841, %v1840
      %v2000 = vpack.c.b16 %v1843, %v1842
      %v2001 = vpack.c.b16 %v1845, %v1844
      %v2002 = vpack.c.b16 %v1847, %v1846
      %v2003 = vpack.c.b16 %v1849, %v1848
      %v2004 = vpack.c.b16 %v1851, %v1850
      %v2005 = vpack.c.b16 %v1853, %v1852
      %v2006 = vpack.c.b16 %v1855, %v1854
      %v2007 = vpack.c.b16 %v1857, %v1856
      %v2008 = vpack.c.b16 %v1859, %v1858
      %v2009 = vpack.c.b16 %v1861, %v1860
      %v2010 = vpack.c.b16 %v1863, %v1862
      %v2011 = vpack.c.b16 %v1865, %v1864
      %v2012 = vpack.c.b16 %v1867, %v1866
      %v2013 = vpack.c.b16 %v1869, %v1868
      %2158 = vmatprep.subr.bf16.mxu0 0
      %2159 = vmatpush1.bf16.msra.mxu0 %v1870
      %2160 = vmatprep.subr.bf16.mxu0 0
      %2161 = vmatpush1.bf16.msra.mxu0 %v1871
      %2162 = vmatprep.subr.bf16.mxu0 0
      %2163 = vmatpush1.bf16.msra.mxu0 %v1872
      %2164 = vmatprep.subr.bf16.mxu0 0
      %2165 = vmatpush1.bf16.msra.mxu0 %v1873
      %2166 = vmatprep.subr.bf16.mxu0 0
      %2167 = vmatpush1.bf16.msra.mxu0 %v1874
      %2168 = vmatprep.subr.bf16.mxu0 0
      %2169 = vmatpush1.bf16.msra.mxu0 %v1875
      %2170 = vmatprep.subr.bf16.mxu0 0
      %2171 = vmatpush1.bf16.msra.mxu0 %v1876
      %2172 = vmatprep.subr.bf16.mxu0 0
      %2173 = vmatpush1.bf16.msra.mxu0 %v1877
      %2174 = vmatprep.subr.bf16.mxu0 0
      %2175 = vmatpush1.bf16.msra.mxu0 %v1878
      %2176 = vmatprep.subr.bf16.mxu0 0
      %2177 = vmatpush1.bf16.msra.mxu0 %v1879
      %2178 = vmatprep.subr.bf16.mxu0 0
      %2179 = vmatpush1.bf16.msra.mxu0 %v1880
      %2180 = vmatprep.subr.bf16.mxu0 0
      %2181 = vmatpush1.bf16.msra.mxu0 %v1881
      %2182 = vmatprep.subr.bf16.mxu0 0
      %2183 = vmatpush1.bf16.msra.mxu0 %v1882
      %2184 = vmatprep.subr.bf16.mxu0 0
      %2185 = vmatpush1.bf16.msra.mxu0 %v1883
      %2186 = vmatprep.subr.bf16.mxu0 0
      %2187 = vmatpush1.bf16.msra.mxu0 %v1884
      %2188 = vmatprep.subr.bf16.mxu0 0
      %2189 = vmatpush1.bf16.msra.mxu0 %v1885
      %2190 = vmatprep.mubr.bf16.mxu0 %v964
      %2191 = vmatmul.mubr.bf16.gmra.mrb[0].mxu0 %v963
      %v2192 = vpop.f32.mrb[0].mxu0
      %v2193 = vadd.f32 %v1292, %v2192
      %v2194 = vpop.f32.mrb[0].mxu0
      %v2195 = vpop.f32.mrb[0].mxu0
      %v2196 = vadd.f32 %v1292, %v2195
      %v2197 = vpop.f32.mrb[0].mxu0
      %2198 = vmatprep.mubr.bf16.mxu0 %v982
      %2199 = vmatmul.mubr.bf16.gmra.mrb[0].mxu0 %v981
      %v2200 = vpop.f32.mrb[0].mxu0
      %v2201 = vadd.f32 %v1292, %v2200
      %v2202 = vpop.f32.mrb[0].mxu0
      %v2203 = vpop.f32.mrb[0].mxu0
      %v2204 = vadd.f32 %v1292, %v2203
      %v2205 = vpop.f32.mrb[0].mxu0
      %2206 = vdwg.mxu0
      %2207 = vmatprep.subr.bf16.mxu0 0
      %2208 = vmatpush1.bf16.msra.mxu0 %v1886
      %2209 = vmatprep.subr.bf16.mxu0 0
      %2210 = vmatpush1.bf16.msra.mxu0 %v1887
      %2211 = vmatprep.subr.bf16.mxu0 0
      %2212 = vmatpush1.bf16.msra.mxu0 %v1888
      %2213 = vmatprep.subr.bf16.mxu0 0
      %2214 = vmatpush1.bf16.msra.mxu0 %v1889
      %2215 = vmatprep.subr.bf16.mxu0 0
      %2216 = vmatpush1.bf16.msra.mxu0 %v1890
      %2217 = vmatprep.subr.bf16.mxu0 0
      %2218 = vmatpush1.bf16.msra.mxu0 %v1891
      %2219 = vmatprep.subr.bf16.mxu0 0
      %2220 = vmatpush1.bf16.msra.mxu0 %v1892
      %2221 = vmatprep.subr.bf16.mxu0 0
      %2222 = vmatpush1.bf16.msra.mxu0 %v1893
      %2223 = vmatprep.subr.bf16.mxu0 0
      %2224 = vmatpush1.bf16.msra.mxu0 %v1894
      %2225 = vmatprep.subr.bf16.mxu0 0
      %2226 = vmatpush1.bf16.msra.mxu0 %v1895
      %2227 = vmatprep.subr.bf16.mxu0 0
      %2228 = vmatpush1.bf16.msra.mxu0 %v1896
      %2229 = vmatprep.subr.bf16.mxu0 0
      %2230 = vmatpush1.bf16.msra.mxu0 %v1897
      %2231 = vmatprep.subr.bf16.mxu0 0
      %2232 = vmatpush1.bf16.msra.mxu0 %v1898
      %2233 = vmatprep.subr.bf16.mxu0 0
      %2234 = vmatpush1.bf16.msra.mxu0 %v1899
      %2235 = vmatprep.subr.bf16.mxu0 0
      %2236 = vmatpush1.bf16.msra.mxu0 %v1900
      %2237 = vmatprep.subr.bf16.mxu0 0
      %2238 = vmatpush1.bf16.msra.mxu0 %v1901
      %2239 = vmatprep.mubr.bf16.mxu0 %v966
      %2240 = vmatmul.mubr.bf16.gmra.mrb[0].mxu0 %v965
      %v2241 = vpop.f32.mrb[0].mxu0
      %v2242 = vadd.f32 %v2193, %v2241
      %v2243 = vpop.f32.mrb[0].mxu0
      %v2244 = vpop.f32.mrb[0].mxu0
      %v2245 = vadd.f32 %v2196, %v2244
      %v2246 = vpop.f32.mrb[0].mxu0
      %2247 = vmatprep.mubr.bf16.mxu0 %v984
      %2248 = vmatmul.mubr.bf16.gmra.mrb[0].mxu0 %v983
      %v2249 = vpop.f32.mrb[0].mxu0
      %v2250 = vadd.f32 %v2201, %v2249
      %v2251 = vpop.f32.mrb[0].mxu0
      %v2252 = vpop.f32.mrb[0].mxu0
      %v2253 = vadd.f32 %v2204, %v2252
      %v2254 = vpop.f32.mrb[0].mxu0
      %2255 = vdwg.mxu0
      %2256 = vmatprep.subr.bf16.mxu0 0
      %2257 = vmatpush1.bf16.msra.mxu0 %v1902
      %2258 = vmatprep.subr.bf16.mxu0 0
      %2259 = vmatpush1.bf16.msra.mxu0 %v1903
      %2260 = vmatprep.subr.bf16.mxu0 0
      %2261 = vmatpush1.bf16.msra.mxu0 %v1904
      %2262 = vmatprep.subr.bf16.mxu0 0
      %2263 = vmatpush1.bf16.msra.mxu0 %v1905
      %2264 = vmatprep.subr.bf16.mxu0 0
      %2265 = vmatpush1.bf16.msra.mxu0 %v1906
      %2266 = vmatprep.subr.bf16.mxu0 0
      %2267 = vmatpush1.bf16.msra.mxu0 %v1907
      %2268 = vmatprep.subr.bf16.mxu0 0
      %2269 = vmatpush1.bf16.msra.mxu0 %v1908
      %2270 = vmatprep.subr.bf16.mxu0 0
      %2271 = vmatpush1.bf16.msra.mxu0 %v1909
      %2272 = vmatprep.subr.bf16.mxu0 0
      %2273 = vmatpush1.bf16.msra.mxu0 %v1910
      %2274 = vmatprep.subr.bf16.mxu0 0
      %2275 = vmatpush1.bf16.msra.mxu0 %v1911
      %2276 = vmatprep.subr.bf16.mxu0 0
      %2277 = vmatpush1.bf16.msra.mxu0 %v1912
      %2278 = vmatprep.subr.bf16.mxu0 0
      %2279 = vmatpush1.bf16.msra.mxu0 %v1913
      %2280 = vmatprep.subr.bf16.mxu0 0
      %2281 = vmatpush1.bf16.msra.mxu0 %v1914
      %2282 = vmatprep.subr.bf16.mxu0 0
      %2283 = vmatpush1.bf16.msra.mxu0 %v1915
      %2284 = vmatprep.subr.bf16.mxu0 0
      %2285 = vmatpush1.bf16.msra.mxu0 %v1916
      %2286 = vmatprep.subr.bf16.mxu0 0
      %2287 = vmatpush1.bf16.msra.mxu0 %v1917
      %2288 = vmatprep.mubr.bf16.mxu0 %v968
      %2289 = vmatmul.mubr.bf16.gmra.mrb[0].mxu0 %v967
      %v2290 = vpop.f32.mrb[0].mxu0
      %v2291 = vadd.f32 %v2242, %v2290
      %v2292 = vpop.f32.mrb[0].mxu0
      %v2293 = vpop.f32.mrb[0].mxu0
      %v2294 = vadd.f32 %v2245, %v2293
      %v2295 = vpop.f32.mrb[0].mxu0
      %2296 = vmatprep.mubr.bf16.mxu0 %v986
      %2297 = vmatmul.mubr.bf16.gmra.mrb[0].mxu0 %v985
      %v2298 = vpop.f32.mrb[0].mxu0
      %v2299 = vadd.f32 %v2250, %v2298
      %v2300 = vpop.f32.mrb[0].mxu0
      %v2301 = vpop.f32.mrb[0].mxu0
      %v2302 = vadd.f32 %v2253, %v2301
      %v2303 = vpop.f32.mrb[0].mxu0
      %2304 = vdwg.mxu0
      %2305 = vmatprep.subr.bf16.mxu0 0
      %2306 = vmatpush1.bf16.msra.mxu0 %v1918
      %2307 = vmatprep.subr.bf16.mxu0 0
      %2308 = vmatpush1.bf16.msra.mxu0 %v1919
      %2309 = vmatprep.subr.bf16.mxu0 0
      %2310 = vmatpush1.bf16.msra.mxu0 %v1920
      %2311 = vmatprep.subr.bf16.mxu0 0
      %2312 = vmatpush1.bf16.msra.mxu0 %v1921
      %2313 = vmatprep.subr.bf16.mxu0 0
      %2314 = vmatpush1.bf16.msra.mxu0 %v1922
      %2315 = vmatprep.subr.bf16.mxu0 0
      %2316 = vmatpush1.bf16.msra.mxu0 %v1923
      %2317 = vmatprep.subr.bf16.mxu0 0
      %2318 = vmatpush1.bf16.msra.mxu0 %v1924
      %2319 = vmatprep.subr.bf16.mxu0 0
      %2320 = vmatpush1.bf16.msra.mxu0 %v1925
      %2321 = vmatprep.subr.bf16.mxu0 0
      %2322 = vmatpush1.bf16.msra.mxu0 %v1926
      %2323 = vmatprep.subr.bf16.mxu0 0
      %2324 = vmatpush1.bf16.msra.mxu0 %v1927
      %2325 = vmatprep.subr.bf16.mxu0 0
      %2326 = vmatpush1.bf16.msra.mxu0 %v1928
      %2327 = vmatprep.subr.bf16.mxu0 0
      %2328 = vmatpush1.bf16.msra.mxu0 %v1929
      %2329 = vmatprep.subr.bf16.mxu0 0
      %2330 = vmatpush1.bf16.msra.mxu0 %v1930
      %2331 = vmatprep.subr.bf16.mxu0 0
      %2332 = vmatpush1.bf16.msra.mxu0 %v1931
      %2333 = vmatprep.subr.bf16.mxu0 0
      %2334 = vmatpush1.bf16.msra.mxu0 %v1932
      %2335 = vmatprep.subr.bf16.mxu0 0
      %2336 = vmatpush1.bf16.msra.mxu0 %v1933
      %2337 = vmatprep.mubr.bf16.mxu0 %v970
      %2338 = vmatmul.mubr.bf16.gmra.mrb[0].mxu0 %v969
      %v2339 = vpop.f32.mrb[0].mxu0
      %v2340 = vadd.f32 %v2291, %v2339
      %v2341 = vpop.f32.mrb[0].mxu0
      %v2342 = vpop.f32.mrb[0].mxu0
      %v2343 = vadd.f32 %v2294, %v2342
      %v2344 = vpop.f32.mrb[0].mxu0
      %2345 = vmatprep.mubr.bf16.mxu0 %v988
      %2346 = vmatmul.mubr.bf16.gmra.mrb[0].mxu0 %v987
      %v2347 = vpop.f32.mrb[0].mxu0
      %v2348 = vadd.f32 %v2299, %v2347
      %v2349 = vpop.f32.mrb[0].mxu0
      %v2350 = vpop.f32.mrb[0].mxu0
      %v2351 = vadd.f32 %v2302, %v2350
      %v2352 = vpop.f32.mrb[0].mxu0
      %2353 = vdwg.mxu0
      %2354 = vmatprep.subr.bf16.mxu0 0
      %2355 = vmatpush1.bf16.msra.mxu0 %v1934
      %2356 = vmatprep.subr.bf16.mxu0 0
      %2357 = vmatpush1.bf16.msra.mxu0 %v1935
      %2358 = vmatprep.subr.bf16.mxu0 0
      %2359 = vmatpush1.bf16.msra.mxu0 %v1936
      %2360 = vmatprep.subr.bf16.mxu0 0
      %2361 = vmatpush1.bf16.msra.mxu0 %v1937
      %2362 = vmatprep.subr.bf16.mxu0 0
      %2363 = vmatpush1.bf16.msra.mxu0 %v1938
      %2364 = vmatprep.subr.bf16.mxu0 0
      %2365 = vmatpush1.bf16.msra.mxu0 %v1939
      %2366 = vmatprep.subr.bf16.mxu0 0
      %2367 = vmatpush1.bf16.msra.mxu0 %v1940
      %2368 = vmatprep.subr.bf16.mxu0 0
      %2369 = vmatpush1.bf16.msra.mxu0 %v1941
      %2370 = vmatprep.subr.bf16.mxu0 0
      %2371 = vmatpush1.bf16.msra.mxu0 %v1942
      %2372 = vmatprep.subr.bf16.mxu0 0
      %2373 = vmatpush1.bf16.msra.mxu0 %v1943
      %2374 = vmatprep.subr.bf16.mxu0 0
      %2375 = vmatpush1.bf16.msra.mxu0 %v1944
      %2376 = vmatprep.subr.bf16.mxu0 0
      %2377 = vmatpush1.bf16.msra.mxu0 %v1945
      %2378 = vmatprep.subr.bf16.mxu0 0
      %2379 = vmatpush1.bf16.msra.mxu0 %v1946
      %2380 = vmatprep.subr.bf16.mxu0 0
      %2381 = vmatpush1.bf16.msra.mxu0 %v1947
      %2382 = vmatprep.subr.bf16.mxu0 0
      %2383 = vmatpush1.bf16.msra.mxu0 %v1948
      %2384 = vmatprep.subr.bf16.mxu0 0
      %2385 = vmatpush1.bf16.msra.mxu0 %v1949
      %2386 = vmatprep.mubr.bf16.mxu0 %v972
      %2387 = vmatmul.mubr.bf16.gmra.mrb[0].mxu0 %v971
      %v2388 = vpop.f32.mrb[0].mxu0
      %v2389 = vadd.f32 %v2340, %v2388
      %v2390 = vpop.f32.mrb[0].mxu0
      %v2391 = vpop.f32.mrb[0].mxu0
      %v2392 = vadd.f32 %v2343, %v2391
      %v2393 = vpop.f32.mrb[0].mxu0
      %2394 = vmatprep.mubr.bf16.mxu0 %v990
      %2395 = vmatmul.mubr.bf16.gmra.mrb[0].mxu0 %v989
      %v2396 = vpop.f32.mrb[0].mxu0
      %v2397 = vadd.f32 %v2348, %v2396
      %v2398 = vpop.f32.mrb[0].mxu0
      %v2399 = vpop.f32.mrb[0].mxu0
      %v2400 = vadd.f32 %v2351, %v2399
      %v2401 = vpop.f32.mrb[0].mxu0
      %2402 = vdwg.mxu0
      %2403 = vmatprep.subr.bf16.mxu0 0
      %2404 = vmatpush1.bf16.msra.mxu0 %v1950
      %2405 = vmatprep.subr.bf16.mxu0 0
      %2406 = vmatpush1.bf16.msra.mxu0 %v1951
      %2407 = vmatprep.subr.bf16.mxu0 0
      %2408 = vmatpush1.bf16.msra.mxu0 %v1952
      %2409 = vmatprep.subr.bf16.mxu0 0
      %2410 = vmatpush1.bf16.msra.mxu0 %v1953
      %2411 = vmatprep.subr.bf16.mxu0 0
      %2412 = vmatpush1.bf16.msra.mxu0 %v1954
      %2413 = vmatprep.subr.bf16.mxu0 0
      %2414 = vmatpush1.bf16.msra.mxu0 %v1955
      %2415 = vmatprep.subr.bf16.mxu0 0
      %2416 = vmatpush1.bf16.msra.mxu0 %v1956
      %2417 = vmatprep.subr.bf16.mxu0 0
      %2418 = vmatpush1.bf16.msra.mxu0 %v1957
      %2419 = vmatprep.subr.bf16.mxu0 0
      %2420 = vmatpush1.bf16.msra.mxu0 %v1958
      %2421 = vmatprep.subr.bf16.mxu0 0
      %2422 = vmatpush1.bf16.msra.mxu0 %v1959
      %2423 = vmatprep.subr.bf16.mxu0 0
      %2424 = vmatpush1.bf16.msra.mxu0 %v1960
      %2425 = vmatprep.subr.bf16.mxu0 0
      %2426 = vmatpush1.bf16.msra.mxu0 %v1961
      %2427 = vmatprep.subr.bf16.mxu0 0
      %2428 = vmatpush1.bf16.msra.mxu0 %v1962
      %2429 = vmatprep.subr.bf16.mxu0 0
      %2430 = vmatpush1.bf16.msra.mxu0 %v1963
      %2431 = vmatprep.subr.bf16.mxu0 0
      %2432 = vmatpush1.bf16.msra.mxu0 %v1964
      %2433 = vmatprep.subr.bf16.mxu0 0
      %2434 = vmatpush1.bf16.msra.mxu0 %v1965
      %2435 = vmatprep.mubr.bf16.mxu0 %v974
      %2436 = vmatmul.mubr.bf16.gmra.mrb[0].mxu0 %v973
      %v2437 = vpop.f32.mrb[0].mxu0
      %v2438 = vadd.f32 %v2389, %v2437
      %v2439 = vpop.f32.mrb[0].mxu0
      %v2440 = vpop.f32.mrb[0].mxu0
      %v2441 = vadd.f32 %v2392, %v2440
      %v2442 = vpop.f32.mrb[0].mxu0
      %2443 = vmatprep.mubr.bf16.mxu0 %v992
      %2444 = vmatmul.mubr.bf16.gmra.mrb[0].mxu0 %v991
      %v2445 = vpop.f32.mrb[0].mxu0
      %v2446 = vadd.f32 %v2397, %v2445
      %v2447 = vpop.f32.mrb[0].mxu0
      %v2448 = vpop.f32.mrb[0].mxu0
      %v2449 = vadd.f32 %v2400, %v2448
      %v2450 = vpop.f32.mrb[0].mxu0
      %2451 = vdwg.mxu0
      %2452 = vmatprep.subr.bf16.mxu0 0
      %2453 = vmatpush1.bf16.msra.mxu0 %v1966
      %2454 = vmatprep.subr.bf16.mxu0 0
      %2455 = vmatpush1.bf16.msra.mxu0 %v1967
      %2456 = vmatprep.subr.bf16.mxu0 0
      %2457 = vmatpush1.bf16.msra.mxu0 %v1968
      %2458 = vmatprep.subr.bf16.mxu0 0
      %2459 = vmatpush1.bf16.msra.mxu0 %v1969
      %2460 = vmatprep.subr.bf16.mxu0 0
      %2461 = vmatpush1.bf16.msra.mxu0 %v1970
      %2462 = vmatprep.subr.bf16.mxu0 0
      %2463 = vmatpush1.bf16.msra.mxu0 %v1971
      %2464 = vmatprep.subr.bf16.mxu0 0
      %2465 = vmatpush1.bf16.msra.mxu0 %v1972
      %2466 = vmatprep.subr.bf16.mxu0 0
      %2467 = vmatpush1.bf16.msra.mxu0 %v1973
      %2468 = vmatprep.subr.bf16.mxu0 0
      %2469 = vmatpush1.bf16.msra.mxu0 %v1974
      %2470 = vmatprep.subr.bf16.mxu0 0
      %2471 = vmatpush1.bf16.msra.mxu0 %v1975
      %2472 = vmatprep.subr.bf16.mxu0 0
      %2473 = vmatpush1.bf16.msra.mxu0 %v1976
      %2474 = vmatprep.subr.bf16.mxu0 0
      %2475 = vmatpush1.bf16.msra.mxu0 %v1977
      %2476 = vmatprep.subr.bf16.mxu0 0
      %2477 = vmatpush1.bf16.msra.mxu0 %v1978
      %2478 = vmatprep.subr.bf16.mxu0 0
      %2479 = vmatpush1.bf16.msra.mxu0 %v1979
      %2480 = vmatprep.subr.bf16.mxu0 0
      %2481 = vmatpush1.bf16.msra.mxu0 %v1980
      %2482 = vmatprep.subr.bf16.mxu0 0
      %2483 = vmatpush1.bf16.msra.mxu0 %v1981
      %2484 = vmatprep.mubr.bf16.mxu0 %v976
      %2485 = vmatmul.mubr.bf16.gmra.mrb[0].mxu0 %v975
      %v2486 = vpop.f32.mrb[0].mxu0
      %v2487 = vadd.f32 %v2438, %v2486
      %v2488 = vpop.f32.mrb[0].mxu0
      %v2489 = vpop.f32.mrb[0].mxu0
      %v2490 = vadd.f32 %v2441, %v2489
      %v2491 = vpop.f32.mrb[0].mxu0
      %2492 = vmatprep.mubr.bf16.mxu0 %v994
      %2493 = vmatmul.mubr.bf16.gmra.mrb[0].mxu0 %v993
      %v2494 = vpop.f32.mrb[0].mxu0
      %v2495 = vadd.f32 %v2446, %v2494
      %v2496 = vpop.f32.mrb[0].mxu0
      %v2497 = vpop.f32.mrb[0].mxu0
      %v2498 = vadd.f32 %v2449, %v2497
      %v2499 = vpop.f32.mrb[0].mxu0
      %2500 = vdwg.mxu0
      %2501 = vmatprep.subr.bf16.mxu0 0
      %2502 = vmatpush1.bf16.msra.mxu0 %v1982
      %2503 = vmatprep.subr.bf16.mxu0 0
      %2504 = vmatpush1.bf16.msra.mxu0 %v1983
      %2505 = vmatprep.subr.bf16.mxu0 0
      %2506 = vmatpush1.bf16.msra.mxu0 %v1984
      %2507 = vmatprep.subr.bf16.mxu0 0
      %2508 = vmatpush1.bf16.msra.mxu0 %v1985
      %2509 = vmatprep.subr.bf16.mxu0 0
      %2510 = vmatpush1.bf16.msra.mxu0 %v1986
      %2511 = vmatprep.subr.bf16.mxu0 0
      %2512 = vmatpush1.bf16.msra.mxu0 %v1987
      %2513 = vmatprep.subr.bf16.mxu0 0
      %2514 = vmatpush1.bf16.msra.mxu0 %v1988
      %2515 = vmatprep.subr.bf16.mxu0 0
      %2516 = vmatpush1.bf16.msra.mxu0 %v1989
      %2517 = vmatprep.subr.bf16.mxu0 0
      %2518 = vmatpush1.bf16.msra.mxu0 %v1990
      %2519 = vmatprep.subr.bf16.mxu0 0
      %2520 = vmatpush1.bf16.msra.mxu0 %v1991
      %2521 = vmatprep.subr.bf16.mxu0 0
      %2522 = vmatpush1.bf16.msra.mxu0 %v1992
      %2523 = vmatprep.subr.bf16.mxu0 0
      %2524 = vmatpush1.bf16.msra.mxu0 %v1993
      %2525 = vmatprep.subr.bf16.mxu0 0
      %2526 = vmatpush1.bf16.msra.mxu0 %v1994
      %2527 = vmatprep.subr.bf16.mxu0 0
      %2528 = vmatpush1.bf16.msra.mxu0 %v1995
      %2529 = vmatprep.subr.bf16.mxu0 0
      %2530 = vmatpush1.bf16.msra.mxu0 %v1996
      %2531 = vmatprep.subr.bf16.mxu0 0
      %2532 = vmatpush1.bf16.msra.mxu0 %v1997
      %2533 = vmatprep.mubr.bf16.mxu0 %v978
      %2534 = vmatmul.mubr.bf16.gmra.mrb[0].mxu0 %v977
      %v2535 = vpop.f32.mrb[0].mxu0
      %v2536 = vadd.f32 %v2487, %v2535
      %v2537 = vpop.f32.mrb[0].mxu0
      %v2538 = vpop.f32.mrb[0].mxu0
      %v2539 = vadd.f32 %v2490, %v2538
      %v2540 = vpop.f32.mrb[0].mxu0
      %2541 = vmatprep.mubr.bf16.mxu0 %v996
      %2542 = vmatmul.mubr.bf16.gmra.mrb[0].mxu0 %v995
      %v2543 = vpop.f32.mrb[0].mxu0
      %v2544 = vadd.f32 %v2495, %v2543
      %v2545 = vpop.f32.mrb[0].mxu0
      %v2546 = vpop.f32.mrb[0].mxu0
      %v2547 = vadd.f32 %v2498, %v2546
      %v2548 = vpop.f32.mrb[0].mxu0
      %2549 = vdwg.mxu0
      %2550 = vmatprep.subr.bf16.mxu0 0
      %2551 = vmatpush1.bf16.msra.mxu0 %v1998
      %2552 = vmatprep.subr.bf16.mxu0 0
      %2553 = vmatpush1.bf16.msra.mxu0 %v1999
      %2554 = vmatprep.subr.bf16.mxu0 0
      %2555 = vmatpush1.bf16.msra.mxu0 %v2000
      %2556 = vmatprep.subr.bf16.mxu0 0
      %2557 = vmatpush1.bf16.msra.mxu0 %v2001
      %2558 = vmatprep.subr.bf16.mxu0 0
      %2559 = vmatpush1.bf16.msra.mxu0 %v2002
      %2560 = vmatprep.subr.bf16.mxu0 0
      %2561 = vmatpush1.bf16.msra.mxu0 %v2003
      %2562 = vmatprep.subr.bf16.mxu0 0
      %2563 = vmatpush1.bf16.msra.mxu0 %v2004
      %2564 = vmatprep.subr.bf16.mxu0 0
      %2565 = vmatpush1.bf16.msra.mxu0 %v2005
      %2566 = vmatprep.subr.bf16.mxu0 0
      %2567 = vmatpush1.bf16.msra.mxu0 %v2006
      %2568 = vmatprep.subr.bf16.mxu0 0
      %2569 = vmatpush1.bf16.msra.mxu0 %v2007
      %2570 = vmatprep.subr.bf16.mxu0 0
      %2571 = vmatpush1.bf16.msra.mxu0 %v2008
      %2572 = vmatprep.subr.bf16.mxu0 0
      %2573 = vmatpush1.bf16.msra.mxu0 %v2009
      %2574 = vmatprep.subr.bf16.mxu0 0
      %2575 = vmatpush1.bf16.msra.mxu0 %v2010
      %2576 = vmatprep.subr.bf16.mxu0 0
      %2577 = vmatpush1.bf16.msra.mxu0 %v2011
      %2578 = vmatprep.subr.bf16.mxu0 0
      %2579 = vmatpush1.bf16.msra.mxu0 %v2012
      %2580 = vmatprep.subr.bf16.mxu0 0
      %2581 = vmatpush1.bf16.msra.mxu0 %v2013
      %2582 = vmatprep.mubr.bf16.mxu0 %v980
      %2583 = vmatmul.mubr.bf16.gmra.mrb[0].mxu0 %v979
      %v2584 = vpop.f32.mrb[0].mxu0
      %v2585 = vadd.f32 %v2536, %v2584
      %v2586 = vpop.f32.mrb[0].mxu0
      %v2587 = vpop.f32.mrb[0].mxu0
      %v2588 = vadd.f32 %v2539, %v2587
      %v2589 = vpop.f32.mrb[0].mxu0
      %2590 = vmatprep.mubr.bf16.mxu0 %v998
      %2591 = vmatmul.mubr.bf16.gmra.mrb[0].mxu0 %v997
      %v2592 = vpop.f32.mrb[0].mxu0
      %v2593 = vadd.f32 %v2544, %v2592
      %v2594 = vpop.f32.mrb[0].mxu0
      %v2595 = vpop.f32.mrb[0].mxu0
      %v2596 = vadd.f32 %v2547, %v2595
      %v2597 = vpop.f32.mrb[0].mxu0
      %2598 = vdwg.mxu0
      %v2599 = vmax.f32 %v2585, 0.0
      %v2600 = vmax.f32 %v2588, 0.0
      %v2601 = vmax.f32 %v2593, 0.0
      %v2602 = vmax.f32 %v2596, 0.0
      %2603 = vst [vmem:[%s224] sm:$0xff] %v2599
      %2604 = vst [vmem:[%s224 + $0x8] sm:$0xff] %v2600
      %2605 = vst [vmem:[%s224 + $0x10] sm:$0xff] %v2601
      %2606 = vst [vmem:[%s224 + $0x18] sm:$0xff] %v2602
      %p2607 = scmp.lt.s32.totalorder %s16, 1
      %s2608 = scalar_select %p2607, %s16, 1
      %s2609 = smul.addr %s2608, 4
      %s2610 = smul.addr %s2609, 8
      %s2611 = scalar_lea.vmem %s5, %s2610
      // Predicated region
      $region41: #{image_feature_extractor_forward.1} parent=39 // pred_check
        %p2612 = pneg %p144
      $region42: #{image_feature_extractor_forward.1} parent=39 // pred_check_branch
        %2614 = sbr.rel (%p2612) target = $region44
      $region43: #{image_feature_extractor_forward.1} parent=39 // pred_region
        _
      $region44: #{image_feature_extractor_forward.1} parent=39 // pred_fallthru
        _
    $region40: #{image_feature_extractor_forward.1} parent=5 // pred_fallthru
      _
    %p2615 = scmp.le.s32.totalorder 2, %s11
    // Predicated region
    $region45: #{image_feature_extractor_forward.1} parent=5 // pred_check
      %p2616 = pneg %p2615
    $region46: #{image_feature_extractor_forward.1} parent=5 // pred_check_branch
      %2618 = sbr.rel (%p2616) target = $region48
    $region47: #{image_feature_extractor_forward.1} parent=5 // pred_region
      %s2619 = ssub.s32 %s11, 2
      // Predicated region
      $region49: #{image_feature_extractor_forward.1} parent=47 // pred_check
        %p2620 = pneg %p150
      $region50: #{image_feature_extractor_forward.1} parent=47 // pred_check_branch
        %2622 = sbr.rel (%p2620) target = $region52
      $region51: #{image_feature_extractor_forward.1} parent=47 // pred_region
        %p2623 = scmp.lt.s32.totalorder %s17, 1
        %s2624 = scalar_select %p2623, %s17, 1
        %s2625 = smul.addr %s2624, 4
        %s2626 = smul.addr %s2625, 8
        %s2627 = scalar_lea.vmem %s5, %s2626
      $region52: #{image_feature_extractor_forward.1} parent=47 // pred_fallthru
        _
    $region48: #{image_feature_extractor_forward.1} parent=5 // pred_fallthru
      _
  $region6: #{image_feature_extractor_forward.1} parent=0 // loop_footer
    %s15 = sadd.s32 1, %s11
  $region7: #{image_feature_extractor_forward.1} parent=0 // loop_footer_branch
    %10 = sbr.rel target = $region3
  $region8: #{image_feature_extractor_forward.1} parent=0 // loop_exit
    _

</llo_original>
